<compile_context>
chip_gen: v7x
topology: tpu7x:2x2x1
jax: 0.10.0
libtpu: 0.0.40
codegen_flags: <defaults>
</compile_context>

<pallas_src>
import math

import jax
import jax.numpy as jnp
import numpy as np
from jax import lax
from jax.experimental import pallas as pl
from jax.experimental.pallas import tpu as pltpu

# ------------------------- problem sizes (small) -------------------------
B = 2        # batch
S = 8        # sequence length
D_MODEL = 32
D_FF = 64
N_HEAD = 4
D_K = 8
D_V = 8      # n_head * d_v == d_model so concat gives d_model
LN_EPS = 1e-5


# ------------------------------ kernel -----------------------------------
def _layer_norm(x, gamma, beta):
    mu = jnp.mean(x, axis=-1, keepdims=True)
    var = jnp.mean((x - mu) ** 2, axis=-1, keepdims=True)
    return (x - mu) * jax.lax.rsqrt(var + LN_EPS) * gamma + beta


def transformer_block_kernel(
    x_ref,
    wq_ref, bq_ref, wk_ref, bk_ref, wv_ref, bv_ref,
    wo_ref, bo_ref,
    g1_ref, be1_ref,
    w1_ref, b1_ref, w2_ref, b2_ref,
    g2_ref, be2_ref,
    o_ref,
    scores_scr,   # (N_HEAD*B*S, S) f32 VMEM — sublane-stacked per-(head,batch) scores
    attn_scr,     # (B*S, D_MODEL) f32 VMEM — concatenated head outputs
):
    xf = x_ref[...]                                   # (B*S, D_MODEL)

    # --- Q/K/V projections (scale folded into Q once) ---
    scale = jnp.float32(1.0 / math.sqrt(D_K))
    q = (jnp.dot(xf, wq_ref[...], preferred_element_type=jnp.float32) + bq_ref[...]) * scale
    k = jnp.dot(xf, wk_ref[...], preferred_element_type=jnp.float32) + bk_ref[...]
    v = jnp.dot(xf, wv_ref[...], preferred_element_type=jnp.float32) + bv_ref[...]

    q3 = q.reshape(B, S, N_HEAD * D_K)
    k3 = k.reshape(B, S, N_HEAD * D_K)
    v3 = v.reshape(B, S, N_HEAD * D_V)

    # --- per-head scores, batched over B, staged sublane-stacked into scratch ---
    dn_scores = (((2,), (2,)), ((0,), (0,)))          # contract feature dim, batch over B
    for h in range(N_HEAD):                           # static unrolled (N_HEAD = 4)
        qh = q3[:, :, h * D_K:(h + 1) * D_K]          # (B, S, D_K)
        kh = k3[:, :, h * D_K:(h + 1) * D_K]          # (B, S, D_K)
        s_h = lax.dot_general(qh, kh, dn_scores,
                              preferred_element_type=jnp.float32)   # (B, S, S)
        scores_scr[h * B * S:(h + 1) * B * S, :] = s_h.reshape(B * S, S)

    # --- one softmax over all (head, batch) rows at once ---
    sc = scores_scr[...]                              # (N_HEAD*B*S, S)
    sc = sc - jnp.max(sc, axis=-1, keepdims=True)
    p_all = jnp.exp(sc)
    p_all = p_all * pl.reciprocal(jnp.sum(p_all, axis=-1, keepdims=True), approx=False)

    # --- per-head PV, written at lane offsets (no concat) ---
    dn_pv = (((2,), (1,)), ((0,), (0,)))
    for h in range(N_HEAD):
        p_h = p_all[h * B * S:(h + 1) * B * S, :].reshape(B, S, S)
        vh = v3[:, :, h * D_V:(h + 1) * D_V]          # (B, S, D_V)
        head = lax.dot_general(p_h, vh, dn_pv,
                               preferred_element_type=jnp.float32)  # (B, S, D_V)
        attn_scr[:, h * D_V:(h + 1) * D_V] = head.reshape(B * S, D_V)

    attn = attn_scr[...]                              # (B*S, D_MODEL)

    # --- WO projection + residual w.r.t. attention output (as in PyTorch code) ---
    y = jnp.dot(attn, wo_ref[...], preferred_element_type=jnp.float32) + bo_ref[...]
    # dropout(attn) == identity in eval mode
    x1 = _layer_norm(y + attn, g1_ref[...], be1_ref[...])

    # --- FeedForward: Linear -> ReLU -> Linear ---
    h1 = jnp.dot(x1, w1_ref[...], preferred_element_type=jnp.float32) + b1_ref[...]
    h1 = jnp.maximum(h1, 0.0)
    ff = jnp.dot(h1, w2_ref[...], preferred_element_type=jnp.float32) + b2_ref[...]
    # dropout(ff) == identity in eval mode
    out = _layer_norm(x1 + ff, g2_ref[...], be2_ref[...])

    o_ref[...] = out.astype(o_ref.dtype)


# ------------------------------ wrapper -----------------------------------
def transformer_block(x, params):
    Bv, Sv, Dv = x.shape
    xf = x.reshape(Bv * Sv, Dv)                       # free view outside the kernel

    def full_spec(a):
        nd = a.ndim
        return pl.BlockSpec(a.shape, lambda *_args, _nd=nd: (0,) * _nd)

    in_specs = [full_spec(xf)] + [full_spec(p) for p in params]
    out_spec = pl.BlockSpec((Bv * Sv, Dv), lambda *_args: (0, 0))

    out = pl.pallas_call(
        transformer_block_kernel,
        out_shape=jax.ShapeDtypeStruct((Bv * Sv, Dv), jnp.float32),
        in_specs=in_specs,
        out_specs=out_spec,
        scratch_shapes=[
            pltpu.VMEM((N_HEAD * Bv * Sv, Sv), jnp.float32),
            pltpu.VMEM((Bv * Sv, Dv), jnp.float32),
        ],
    )(xf, *params)
    return out.reshape(Bv, Sv, Dv)


# --------------------------- pure-JAX reference ----------------------------
def reference(x, params):
    (wq, bq, wk, bk, wv, bv, wo, bo, g1, be1, w1, b1, w2, b2, g2, be2) = params

    def ln(v, g, b):
        mu = jnp.mean(v, axis=-1, keepdims=True)
        var = jnp.mean((v - mu) ** 2, axis=-1, keepdims=True)
        return (v - mu) / jnp.sqrt(var + LN_EPS) * g + b

    q = x @ wq + bq
    k = x @ wk + bk
    v = x @ wv + bv
    q = q.reshape(B, S, N_HEAD, D_K).transpose(0, 2, 1, 3)
    k = k.reshape(B, S, N_HEAD, D_K).transpose(0, 2, 1, 3)
    v = v.reshape(B, S, N_HEAD, D_V).transpose(0, 2, 1, 3)
    scores = jnp.einsum("bhqd,bhkd->bhqk", q, k) / math.sqrt(D_K)
    p = jax.nn.softmax(scores, axis=-1)
    attn = jnp.einsum("bhqk,bhkd->bhqd", p, v).transpose(0, 2, 1, 3).reshape(B, S, D_MODEL)
    y = attn @ wo + bo
    x1 = ln(y + attn, g1, be1)
    ff = jnp.maximum(x1 @ w1 + b1, 0.0) @ w2 + b2
    return ln(x1 + ff, g2, be2)


# ------------------------------- main --------------------------------------
if __name__ == "__main__":
    key = jax.random.PRNGKey(0)
    ks = jax.random.split(key, 16)

    def lin_w(k, fan_in, fan_out):
        bound = 1.0 / math.sqrt(fan_in)
        return jax.random.uniform(k, (fan_in, fan_out), jnp.float32, -bound, bound)

    def lin_b(k, fan_in, fan_out):
        bound = 1.0 / math.sqrt(fan_in)
        return jax.random.uniform(k, (1, fan_out), jnp.float32, -bound, bound)

    # Attention projections
    wq = lin_w(ks[0], D_MODEL, N_HEAD * D_K); bq = lin_b(ks[1], D_MODEL, N_HEAD * D_K)
    wk = lin_w(ks[2], D_MODEL, N_HEAD * D_K); bk = lin_b(ks[3], D_MODEL, N_HEAD * D_K)
    wv = lin_w(ks[4], D_MODEL, N_HEAD * D_V); bv = lin_b(ks[5], D_MODEL, N_HEAD * D_V)
    # Block output projection WO
    wo = lin_w(ks[6], D_MODEL, D_MODEL); bo = lin_b(ks[7], D_MODEL, D_MODEL)
    # LayerNorm 1
    g1 = jnp.ones((1, D_MODEL), jnp.float32); be1 = jnp.zeros((1, D_MODEL), jnp.float32)
    # FeedForward
    w1 = lin_w(ks[8], D_MODEL, D_FF); b1 = lin_b(ks[9], D_MODEL, D_FF)
    w2 = lin_w(ks[10], D_FF, D_MODEL); b2 = lin_b(ks[11], D_FF, D_MODEL)
    # LayerNorm 2
    g2 = jnp.ones((1, D_MODEL), jnp.float32); be2 = jnp.zeros((1, D_MODEL), jnp.float32)

    params = (wq, bq, wk, bk, wv, bv, wo, bo, g1, be1, w1, b1, w2, b2, g2, be2)

    x = jax.random.normal(ks[12], (B, S, D_MODEL), jnp.float32)

    out = transformer_block(x, params)
    out = jax.block_until_ready(out)

    ref = jax.block_until_ready(reference(x, params))
    np.testing.assert_allclose(np.asarray(out), np.asarray(ref), atol=1e-4, rtol=1e-4)

    print("KERNEL_OK")
</pallas_src>

<mosaic_0001>
module attributes {stable_mosaic.version = 11 : i64} {
  func.func @transformer_block_kernel(%arg0: memref<16x32xf32, #tpu.memory_space<vmem>>, %arg1: memref<32x32xf32, #tpu.memory_space<vmem>>, %arg2: memref<1x32xf32, #tpu.memory_space<vmem>>, %arg3: memref<32x32xf32, #tpu.memory_space<vmem>>, %arg4: memref<1x32xf32, #tpu.memory_space<vmem>>, %arg5: memref<32x32xf32, #tpu.memory_space<vmem>>, %arg6: memref<1x32xf32, #tpu.memory_space<vmem>>, %arg7: memref<32x32xf32, #tpu.memory_space<vmem>>, %arg8: memref<1x32xf32, #tpu.memory_space<vmem>>, %arg9: memref<1x32xf32, #tpu.memory_space<vmem>>, %arg10: memref<1x32xf32, #tpu.memory_space<vmem>>, %arg11: memref<32x64xf32, #tpu.memory_space<vmem>>, %arg12: memref<1x64xf32, #tpu.memory_space<vmem>>, %arg13: memref<64x32xf32, #tpu.memory_space<vmem>>, %arg14: memref<1x32xf32, #tpu.memory_space<vmem>>, %arg15: memref<1x32xf32, #tpu.memory_space<vmem>>, %arg16: memref<1x32xf32, #tpu.memory_space<vmem>>, %arg17: memref<16x32xf32, #tpu.memory_space<vmem>>, %arg18: memref<64x8xf32, #tpu.memory_space<vmem>>, %arg19: memref<16x32xf32, #tpu.memory_space<vmem>>) attributes {dimension_semantics = [], scalar_prefetch = 0 : i64, scratch_operands = 2 : i64, tpu.core_type = #tpu.core_type<tc>} {
    %c0 = arith.constant 0 : index
    %c0_0 = arith.constant 0 : index
    %0 = vector.load %arg0[%c0, %c0_0] : memref<16x32xf32, #tpu.memory_space<vmem>>, vector<16x32xf32>
    %c0_1 = arith.constant 0 : index
    %c0_2 = arith.constant 0 : index
    %1 = vector.load %arg1[%c0_1, %c0_2] : memref<32x32xf32, #tpu.memory_space<vmem>>, vector<32x32xf32>
    %cst = arith.constant dense<0.000000e+00> : vector<16x32xf32>
    %2 = tpu.matmul %0, %1, %cst {dimension_numbers = #tpu.dot_dimension_numbers<[1], [0], [0], [1], [0, 0, 1, 1], [], []>} : vector<16x32xf32>, vector<32x32xf32>, vector<16x32xf32> -> vector<16x32xf32>
    %c0_3 = arith.constant 0 : index
    %c0_4 = arith.constant 0 : index
    %3 = vector.load %arg2[%c0_3, %c0_4] : memref<1x32xf32, #tpu.memory_space<vmem>>, vector<1x32xf32>
    %4 = vector.broadcast %3 : vector<1x32xf32> to vector<16x32xf32>
    %5 = arith.addf %2, %4 : vector<16x32xf32>
    %cst_5 = arith.constant 0.353553385 : f32
    %6 = vector.broadcast %cst_5 : f32 to vector<16x32xf32>
    %7 = arith.mulf %5, %6 : vector<16x32xf32>
    %c0_6 = arith.constant 0 : index
    %c0_7 = arith.constant 0 : index
    %8 = vector.load %arg3[%c0_6, %c0_7] : memref<32x32xf32, #tpu.memory_space<vmem>>, vector<32x32xf32>
    %cst_8 = arith.constant dense<0.000000e+00> : vector<16x32xf32>
    %9 = tpu.matmul %0, %8, %cst_8 {dimension_numbers = #tpu.dot_dimension_numbers<[1], [0], [0], [1], [0, 0, 1, 1], [], []>} : vector<16x32xf32>, vector<32x32xf32>, vector<16x32xf32> -> vector<16x32xf32>
    %c0_9 = arith.constant 0 : index
    %c0_10 = arith.constant 0 : index
    %10 = vector.load %arg4[%c0_9, %c0_10] : memref<1x32xf32, #tpu.memory_space<vmem>>, vector<1x32xf32>
    %11 = vector.broadcast %10 : vector<1x32xf32> to vector<16x32xf32>
    %12 = arith.addf %9, %11 : vector<16x32xf32>
    %c0_11 = arith.constant 0 : index
    %c0_12 = arith.constant 0 : index
    %13 = vector.load %arg5[%c0_11, %c0_12] : memref<32x32xf32, #tpu.memory_space<vmem>>, vector<32x32xf32>
    %cst_13 = arith.constant dense<0.000000e+00> : vector<16x32xf32>
    %14 = tpu.matmul %0, %13, %cst_13 {dimension_numbers = #tpu.dot_dimension_numbers<[1], [0], [0], [1], [0, 0, 1, 1], [], []>} : vector<16x32xf32>, vector<32x32xf32>, vector<16x32xf32> -> vector<16x32xf32>
    %c0_14 = arith.constant 0 : index
    %c0_15 = arith.constant 0 : index
    %15 = vector.load %arg6[%c0_14, %c0_15] : memref<1x32xf32, #tpu.memory_space<vmem>>, vector<1x32xf32>
    %16 = vector.broadcast %15 : vector<1x32xf32> to vector<16x32xf32>
    %17 = arith.addf %14, %16 : vector<16x32xf32>
    %18 = vector.shape_cast %7 : vector<16x32xf32> to vector<2x8x32xf32>
    %19 = vector.shape_cast %12 : vector<16x32xf32> to vector<2x8x32xf32>
    %20 = vector.shape_cast %17 : vector<16x32xf32> to vector<2x8x32xf32>
    %21 = vector.extract_strided_slice %18 {offsets = [0, 0, 0], sizes = [2, 8, 8], strides = [1, 1, 1]} : vector<2x8x32xf32> to vector<2x8x8xf32>
    %22 = vector.extract_strided_slice %19 {offsets = [0, 0, 0], sizes = [2, 8, 8], strides = [1, 1, 1]} : vector<2x8x32xf32> to vector<2x8x8xf32>
    %cst_16 = arith.constant dense<0.000000e+00> : vector<2x8x8xf32>
    %23 = tpu.matmul %21, %22, %cst_16 {dimension_numbers = #tpu.dot_dimension_numbers<[2], [2], [1], [1], [0, 0, 0, 1, 1, 1], [0], [0]>} : vector<2x8x8xf32>, vector<2x8x8xf32>, vector<2x8x8xf32> -> vector<2x8x8xf32>
    %24 = vector.shape_cast %23 : vector<2x8x8xf32> to vector<16x8xf32>
    %c0_17 = arith.constant 0 : index
    %c0_18 = arith.constant 0 : index
    %25 = vector.load %arg18[%c0_17, %c0_18] : memref<64x8xf32, #tpu.memory_space<vmem>>, vector<16x8xf32>
    tpu.vector_store %arg18[%c0_17, %c0_18], %24 {strides = array<i32>} : memref<64x8xf32, #tpu.memory_space<vmem>>, vector<16x8xf32>,
    %26 = vector.extract_strided_slice %18 {offsets = [0, 0, 8], sizes = [2, 8, 8], strides = [1, 1, 1]} : vector<2x8x32xf32> to vector<2x8x8xf32>
    %27 = vector.extract_strided_slice %19 {offsets = [0, 0, 8], sizes = [2, 8, 8], strides = [1, 1, 1]} : vector<2x8x32xf32> to vector<2x8x8xf32>
    %cst_19 = arith.constant dense<0.000000e+00> : vector<2x8x8xf32>
    %28 = tpu.matmul %26, %27, %cst_19 {dimension_numbers = #tpu.dot_dimension_numbers<[2], [2], [1], [1], [0, 0, 0, 1, 1, 1], [0], [0]>} : vector<2x8x8xf32>, vector<2x8x8xf32>, vector<2x8x8xf32> -> vector<2x8x8xf32>
    %29 = vector.shape_cast %28 : vector<2x8x8xf32> to vector<16x8xf32>
    %c16 = arith.constant 16 : index
    %c0_20 = arith.constant 0 : index
    %30 = vector.load %arg18[%c16, %c0_20] : memref<64x8xf32, #tpu.memory_space<vmem>>, vector<16x8xf32>
    tpu.vector_store %arg18[%c16, %c0_20], %29 {strides = array<i32>} : memref<64x8xf32, #tpu.memory_space<vmem>>, vector<16x8xf32>,
    %31 = vector.extract_strided_slice %18 {offsets = [0, 0, 16], sizes = [2, 8, 8], strides = [1, 1, 1]} : vector<2x8x32xf32> to vector<2x8x8xf32>
    %32 = vector.extract_strided_slice %19 {offsets = [0, 0, 16], sizes = [2, 8, 8], strides = [1, 1, 1]} : vector<2x8x32xf32> to vector<2x8x8xf32>
    %cst_21 = arith.constant dense<0.000000e+00> : vector<2x8x8xf32>
    %33 = tpu.matmul %31, %32, %cst_21 {dimension_numbers = #tpu.dot_dimension_numbers<[2], [2], [1], [1], [0, 0, 0, 1, 1, 1], [0], [0]>} : vector<2x8x8xf32>, vector<2x8x8xf32>, vector<2x8x8xf32> -> vector<2x8x8xf32>
    %34 = vector.shape_cast %33 : vector<2x8x8xf32> to vector<16x8xf32>
    %c32 = arith.constant 32 : index
    %c0_22 = arith.constant 0 : index
    %35 = vector.load %arg18[%c32, %c0_22] : memref<64x8xf32, #tpu.memory_space<vmem>>, vector<16x8xf32>
    tpu.vector_store %arg18[%c32, %c0_22], %34 {strides = array<i32>} : memref<64x8xf32, #tpu.memory_space<vmem>>, vector<16x8xf32>,
    %36 = vector.extract_strided_slice %18 {offsets = [0, 0, 24], sizes = [2, 8, 8], strides = [1, 1, 1]} : vector<2x8x32xf32> to vector<2x8x8xf32>
    %37 = vector.extract_strided_slice %19 {offsets = [0, 0, 24], sizes = [2, 8, 8], strides = [1, 1, 1]} : vector<2x8x32xf32> to vector<2x8x8xf32>
    %cst_23 = arith.constant dense<0.000000e+00> : vector<2x8x8xf32>
    %38 = tpu.matmul %36, %37, %cst_23 {dimension_numbers = #tpu.dot_dimension_numbers<[2], [2], [1], [1], [0, 0, 0, 1, 1, 1], [0], [0]>} : vector<2x8x8xf32>, vector<2x8x8xf32>, vector<2x8x8xf32> -> vector<2x8x8xf32>
    %39 = vector.shape_cast %38 : vector<2x8x8xf32> to vector<16x8xf32>
    %c48 = arith.constant 48 : index
    %c0_24 = arith.constant 0 : index
    %40 = vector.load %arg18[%c48, %c0_24] : memref<64x8xf32, #tpu.memory_space<vmem>>, vector<16x8xf32>
    tpu.vector_store %arg18[%c48, %c0_24], %39 {strides = array<i32>} : memref<64x8xf32, #tpu.memory_space<vmem>>, vector<16x8xf32>,
    %c0_25 = arith.constant 0 : index
    %c0_26 = arith.constant 0 : index
    %41 = vector.load %arg18[%c0_25, %c0_26] : memref<64x8xf32, #tpu.memory_space<vmem>>, vector<64x8xf32>
    %cst_27 = arith.constant dense<0xFF800000> : vector<64xf32>
    %42 = vector.multi_reduction <maximumf>, %41, %cst_27 [1] : vector<64x8xf32> to vector<64xf32>
    %43 = vector.shape_cast %42 : vector<64xf32> to vector<64x1xf32>
    %44 = vector.broadcast %43 : vector<64x1xf32> to vector<64x8xf32>
    %45 = arith.subf %41, %44 : vector<64x8xf32>
    %46 = math.exp %45 : vector<64x8xf32>
    %cst_28 = arith.constant dense<0.000000e+00> : vector<64xf32>
    %47 = vector.multi_reduction <add>, %46, %cst_28 [1] : vector<64x8xf32> to vector<64xf32>
    %48 = vector.shape_cast %47 : vector<64xf32> to vector<64x1xf32>
    %49 = tpu.reciprocal %48 : vector<64x1xf32> -> vector<64x1xf32>
    %50 = vector.broadcast %49 : vector<64x1xf32> to vector<64x8xf32>
    %51 = arith.mulf %46, %50 : vector<64x8xf32>
    %52 = vector.extract_strided_slice %51 {offsets = [0, 0], sizes = [16, 8], strides = [1, 1]} : vector<64x8xf32> to vector<16x8xf32>
    %53 = vector.shape_cast %52 : vector<16x8xf32> to vector<2x8x8xf32>
    %54 = vector.extract_strided_slice %20 {offsets = [0, 0, 0], sizes = [2, 8, 8], strides = [1, 1, 1]} : vector<2x8x32xf32> to vector<2x8x8xf32>
    %cst_29 = arith.constant dense<0.000000e+00> : vector<2x8x8xf32>
    %55 = tpu.matmul %53, %54, %cst_29 {dimension_numbers = #tpu.dot_dimension_numbers<[2], [1], [1], [2], [0, 0, 0, 1, 1, 2], [0], [0]>} : vector<2x8x8xf32>, vector<2x8x8xf32>, vector<2x8x8xf32> -> vector<2x8x8xf32>
    %56 = vector.shape_cast %55 : vector<2x8x8xf32> to vector<16x8xf32>
    %c0_30 = arith.constant 0 : index
    %c0_31 = arith.constant 0 : index
    %57 = vector.load %arg19[%c0_30, %c0_31] : memref<16x32xf32, #tpu.memory_space<vmem>>, vector<16x8xf32>
    tpu.vector_store %arg19[%c0_30, %c0_31], %56 {strides = array<i32>} : memref<16x32xf32, #tpu.memory_space<vmem>>, vector<16x8xf32>,
    %58 = vector.extract_strided_slice %51 {offsets = [16, 0], sizes = [16, 8], strides = [1, 1]} : vector<64x8xf32> to vector<16x8xf32>
    %59 = vector.shape_cast %58 : vector<16x8xf32> to vector<2x8x8xf32>
    %60 = vector.extract_strided_slice %20 {offsets = [0, 0, 8], sizes = [2, 8, 8], strides = [1, 1, 1]} : vector<2x8x32xf32> to vector<2x8x8xf32>
    %cst_32 = arith.constant dense<0.000000e+00> : vector<2x8x8xf32>
    %61 = tpu.matmul %59, %60, %cst_32 {dimension_numbers = #tpu.dot_dimension_numbers<[2], [1], [1], [2], [0, 0, 0, 1, 1, 2], [0], [0]>} : vector<2x8x8xf32>, vector<2x8x8xf32>, vector<2x8x8xf32> -> vector<2x8x8xf32>
    %62 = vector.shape_cast %61 : vector<2x8x8xf32> to vector<16x8xf32>
    %c0_33 = arith.constant 0 : index
    %c8 = arith.constant 8 : index
    %63 = vector.load %arg19[%c0_33, %c8] : memref<16x32xf32, #tpu.memory_space<vmem>>, vector<16x8xf32>
    tpu.vector_store %arg19[%c0_33, %c8], %62 {strides = array<i32>} : memref<16x32xf32, #tpu.memory_space<vmem>>, vector<16x8xf32>,
    %64 = vector.extract_strided_slice %51 {offsets = [32, 0], sizes = [16, 8], strides = [1, 1]} : vector<64x8xf32> to vector<16x8xf32>
    %65 = vector.shape_cast %64 : vector<16x8xf32> to vector<2x8x8xf32>
    %66 = vector.extract_strided_slice %20 {offsets = [0, 0, 16], sizes = [2, 8, 8], strides = [1, 1, 1]} : vector<2x8x32xf32> to vector<2x8x8xf32>
    %cst_34 = arith.constant dense<0.000000e+00> : vector<2x8x8xf32>
    %67 = tpu.matmul %65, %66, %cst_34 {dimension_numbers = #tpu.dot_dimension_numbers<[2], [1], [1], [2], [0, 0, 0, 1, 1, 2], [0], [0]>} : vector<2x8x8xf32>, vector<2x8x8xf32>, vector<2x8x8xf32> -> vector<2x8x8xf32>
    %68 = vector.shape_cast %67 : vector<2x8x8xf32> to vector<16x8xf32>
    %c0_35 = arith.constant 0 : index
    %c16_36 = arith.constant 16 : index
    %69 = vector.load %arg19[%c0_35, %c16_36] : memref<16x32xf32, #tpu.memory_space<vmem>>, vector<16x8xf32>
    tpu.vector_store %arg19[%c0_35, %c16_36], %68 {strides = array<i32>} : memref<16x32xf32, #tpu.memory_space<vmem>>, vector<16x8xf32>,
    %70 = vector.extract_strided_slice %51 {offsets = [48, 0], sizes = [16, 8], strides = [1, 1]} : vector<64x8xf32> to vector<16x8xf32>
    %71 = vector.shape_cast %70 : vector<16x8xf32> to vector<2x8x8xf32>
    %72 = vector.extract_strided_slice %20 {offsets = [0, 0, 24], sizes = [2, 8, 8], strides = [1, 1, 1]} : vector<2x8x32xf32> to vector<2x8x8xf32>
    %cst_37 = arith.constant dense<0.000000e+00> : vector<2x8x8xf32>
    %73 = tpu.matmul %71, %72, %cst_37 {dimension_numbers = #tpu.dot_dimension_numbers<[2], [1], [1], [2], [0, 0, 0, 1, 1, 2], [0], [0]>} : vector<2x8x8xf32>, vector<2x8x8xf32>, vector<2x8x8xf32> -> vector<2x8x8xf32>
    %74 = vector.shape_cast %73 : vector<2x8x8xf32> to vector<16x8xf32>
    %c0_38 = arith.constant 0 : index
    %c24 = arith.constant 24 : index
    %75 = vector.load %arg19[%c0_38, %c24] : memref<16x32xf32, #tpu.memory_space<vmem>>, vector<16x8xf32>
    tpu.vector_store %arg19[%c0_38, %c24], %74 {strides = array<i32>} : memref<16x32xf32, #tpu.memory_space<vmem>>, vector<16x8xf32>,
    %c0_39 = arith.constant 0 : index
    %c0_40 = arith.constant 0 : index
    %76 = vector.load %arg19[%c0_39, %c0_40] : memref<16x32xf32, #tpu.memory_space<vmem>>, vector<16x32xf32>
    %c0_41 = arith.constant 0 : index
    %c0_42 = arith.constant 0 : index
    %77 = vector.load %arg7[%c0_41, %c0_42] : memref<32x32xf32, #tpu.memory_space<vmem>>, vector<32x32xf32>
    %cst_43 = arith.constant dense<0.000000e+00> : vector<16x32xf32>
    %78 = tpu.matmul %76, %77, %cst_43 {dimension_numbers = #tpu.dot_dimension_numbers<[1], [0], [0], [1], [0, 0, 1, 1], [], []>} : vector<16x32xf32>, vector<32x32xf32>, vector<16x32xf32> -> vector<16x32xf32>
    %c0_44 = arith.constant 0 : index
    %c0_45 = arith.constant 0 : index
    %79 = vector.load %arg8[%c0_44, %c0_45] : memref<1x32xf32, #tpu.memory_space<vmem>>, vector<1x32xf32>
    %80 = vector.broadcast %79 : vector<1x32xf32> to vector<16x32xf32>
    %81 = arith.addf %78, %80 : vector<16x32xf32>
    %82 = arith.addf %81, %76 : vector<16x32xf32>
    %c0_46 = arith.constant 0 : index
    %c0_47 = arith.constant 0 : index
    %83 = vector.load %arg9[%c0_46, %c0_47] : memref<1x32xf32, #tpu.memory_space<vmem>>, vector<1x32xf32>
    %c0_48 = arith.constant 0 : index
    %c0_49 = arith.constant 0 : index
    %84 = vector.load %arg10[%c0_48, %c0_49] : memref<1x32xf32, #tpu.memory_space<vmem>>, vector<1x32xf32>
    %cst_50 = arith.constant dense<0.000000e+00> : vector<16xf32>
    %85 = vector.multi_reduction <add>, %82, %cst_50 [1] : vector<16x32xf32> to vector<16xf32>
    %86 = vector.shape_cast %85 : vector<16xf32> to vector<16x1xf32>
    %cst_51 = arith.constant 3.200000e+01 : f32
    %87 = vector.broadcast %cst_51 : f32 to vector<16x1xf32>
    %88 = arith.divf %86, %87 : vector<16x1xf32>
    %89 = vector.broadcast %88 : vector<16x1xf32> to vector<16x32xf32>
    %90 = arith.subf %82, %89 : vector<16x32xf32>
    %91 = arith.mulf %90, %90 : vector<16x32xf32>
    %cst_52 = arith.constant dense<0.000000e+00> : vector<16xf32>
    %92 = vector.multi_reduction <add>, %91, %cst_52 [1] : vector<16x32xf32> to vector<16xf32>
    %93 = vector.shape_cast %92 : vector<16xf32> to vector<16x1xf32>
    %cst_53 = arith.constant 3.200000e+01 : f32
    %94 = vector.broadcast %cst_53 : f32 to vector<16x1xf32>
    %95 = arith.divf %93, %94 : vector<16x1xf32>
    %96 = vector.broadcast %88 : vector<16x1xf32> to vector<16x32xf32>
    %97 = arith.subf %82, %96 : vector<16x32xf32>
    %cst_54 = arith.constant 9.99999974E-6 : f32
    %98 = vector.broadcast %cst_54 : f32 to vector<16x1xf32>
    %99 = arith.addf %95, %98 : vector<16x1xf32>
    %100 = math.rsqrt %99 : vector<16x1xf32>
    %101 = vector.broadcast %100 : vector<16x1xf32> to vector<16x32xf32>
    %102 = arith.mulf %97, %101 : vector<16x32xf32>
    %103 = vector.broadcast %83 : vector<1x32xf32> to vector<16x32xf32>
    %104 = arith.mulf %102, %103 : vector<16x32xf32>
    %105 = vector.broadcast %84 : vector<1x32xf32> to vector<16x32xf32>
    %106 = arith.addf %104, %105 : vector<16x32xf32>
    %c0_55 = arith.constant 0 : index
    %c0_56 = arith.constant 0 : index
    %107 = vector.load %arg11[%c0_55, %c0_56] : memref<32x64xf32, #tpu.memory_space<vmem>>, vector<32x64xf32>
    %cst_57 = arith.constant dense<0.000000e+00> : vector<16x64xf32>
    %108 = tpu.matmul %106, %107, %cst_57 {dimension_numbers = #tpu.dot_dimension_numbers<[1], [0], [0], [1], [0, 0, 1, 1], [], []>} : vector<16x32xf32>, vector<32x64xf32>, vector<16x64xf32> -> vector<16x64xf32>
    %c0_58 = arith.constant 0 : index
    %c0_59 = arith.constant 0 : index
    %109 = vector.load %arg12[%c0_58, %c0_59] : memref<1x64xf32, #tpu.memory_space<vmem>>, vector<1x64xf32>
    %110 = vector.broadcast %109 : vector<1x64xf32> to vector<16x64xf32>
    %111 = arith.addf %108, %110 : vector<16x64xf32>
    %cst_60 = arith.constant 0.000000e+00 : f32
    %112 = vector.broadcast %cst_60 : f32 to vector<16x64xf32>
    %113 = arith.maximumf %111, %112 : vector<16x64xf32>
    %c0_61 = arith.constant 0 : index
    %c0_62 = arith.constant 0 : index
    %114 = vector.load %arg13[%c0_61, %c0_62] : memref<64x32xf32, #tpu.memory_space<vmem>>, vector<64x32xf32>
    %cst_63 = arith.constant dense<0.000000e+00> : vector<16x32xf32>
    %115 = tpu.matmul %113, %114, %cst_63 {dimension_numbers = #tpu.dot_dimension_numbers<[1], [0], [0], [1], [0, 0, 1, 1], [], []>} : vector<16x64xf32>, vector<64x32xf32>, vector<16x32xf32> -> vector<16x32xf32>
    %c0_64 = arith.constant 0 : index
    %c0_65 = arith.constant 0 : index
    %116 = vector.load %arg14[%c0_64, %c0_65] : memref<1x32xf32, #tpu.memory_space<vmem>>, vector<1x32xf32>
    %117 = vector.broadcast %116 : vector<1x32xf32> to vector<16x32xf32>
    %118 = arith.addf %115, %117 : vector<16x32xf32>
    %119 = arith.addf %106, %118 : vector<16x32xf32>
    %c0_66 = arith.constant 0 : index
    %c0_67 = arith.constant 0 : index
    %120 = vector.load %arg15[%c0_66, %c0_67] : memref<1x32xf32, #tpu.memory_space<vmem>>, vector<1x32xf32>
    %c0_68 = arith.constant 0 : index
    %c0_69 = arith.constant 0 : index
    %121 = vector.load %arg16[%c0_68, %c0_69] : memref<1x32xf32, #tpu.memory_space<vmem>>, vector<1x32xf32>
    %cst_70 = arith.constant dense<0.000000e+00> : vector<16xf32>
    %122 = vector.multi_reduction <add>, %119, %cst_70 [1] : vector<16x32xf32> to vector<16xf32>
    %123 = vector.shape_cast %122 : vector<16xf32> to vector<16x1xf32>
    %cst_71 = arith.constant 3.200000e+01 : f32
    %124 = vector.broadcast %cst_71 : f32 to vector<16x1xf32>
    %125 = arith.divf %123, %124 : vector<16x1xf32>
    %126 = vector.broadcast %125 : vector<16x1xf32> to vector<16x32xf32>
    %127 = arith.subf %119, %126 : vector<16x32xf32>
    %128 = arith.mulf %127, %127 : vector<16x32xf32>
    %cst_72 = arith.constant dense<0.000000e+00> : vector<16xf32>
    %129 = vector.multi_reduction <add>, %128, %cst_72 [1] : vector<16x32xf32> to vector<16xf32>
    %130 = vector.shape_cast %129 : vector<16xf32> to vector<16x1xf32>
    %cst_73 = arith.constant 3.200000e+01 : f32
    %131 = vector.broadcast %cst_73 : f32 to vector<16x1xf32>
    %132 = arith.divf %130, %131 : vector<16x1xf32>
    %133 = vector.broadcast %125 : vector<16x1xf32> to vector<16x32xf32>
    %134 = arith.subf %119, %133 : vector<16x32xf32>
    %cst_74 = arith.constant 9.99999974E-6 : f32
    %135 = vector.broadcast %cst_74 : f32 to vector<16x1xf32>
    %136 = arith.addf %132, %135 : vector<16x1xf32>
    %137 = math.rsqrt %136 : vector<16x1xf32>
    %138 = vector.broadcast %137 : vector<16x1xf32> to vector<16x32xf32>
    %139 = arith.mulf %134, %138 : vector<16x32xf32>
    %140 = vector.broadcast %120 : vector<1x32xf32> to vector<16x32xf32>
    %141 = arith.mulf %139, %140 : vector<16x32xf32>
    %142 = vector.broadcast %121 : vector<1x32xf32> to vector<16x32xf32>
    %143 = arith.addf %141, %142 : vector<16x32xf32>
    %c0_75 = arith.constant 0 : index
    %c0_76 = arith.constant 0 : index
    %144 = vector.load %arg17[%c0_75, %c0_76] : memref<16x32xf32, #tpu.memory_space<vmem>>, vector<16x32xf32>
    tpu.vector_store %arg17[%c0_75, %c0_76], %143 {strides = array<i32>} : memref<16x32xf32, #tpu.memory_space<vmem>>, vector<16x32xf32>,
    return
  }
}

</mosaic_0001>

<llo_original>
// kernel: tpu_custom_call.1
$region0: #{tpu_custom_call.1}
  #allocation0 [shape = 'u32[]', space=smem, size = 0x4, offset = 0x4, fixed_abs, tag = 'smem constant byte address 0x4 - core index']
  #allocation1 [shape = 'u32[144,128]{1,0:T(1,128)}', space=vmem, size = 0x12000, scoped, tag = 'internal scratch']
  #allocation2 [shape = 'f32[64,8]{1,0:T(8,128)}', space=vmem, size = 0x8000, scoped, tag = 'scratch operand']
  #allocation3 [shape = 'f32[16,32]{1,0:T(8,128)}', space=vmem, size = 0x2000, scoped, tag = 'scratch operand']
  %s0 = inlined_call_operand.hbm [shape: f32[16,32], index: 0, kind: input, shape index: {}]
  %s1 = inlined_call_operand.vmem [shape: f32[32,32], index: 1, kind: input, shape index: {}]
  %s2 = inlined_call_operand.vmem [shape: f32[1,32], index: 2, kind: input, shape index: {}]
  %s3 = inlined_call_operand.vmem [shape: f32[32,32], index: 3, kind: input, shape index: {}]
  %s4 = inlined_call_operand.vmem [shape: f32[1,32], index: 4, kind: input, shape index: {}]
  %s5 = inlined_call_operand.vmem [shape: f32[32,32], index: 5, kind: input, shape index: {}]
  %s6 = inlined_call_operand.vmem [shape: f32[1,32], index: 6, kind: input, shape index: {}]
  %s7 = inlined_call_operand.hbm [shape: f32[32,32], index: 7, kind: input, shape index: {}]
  %s8 = inlined_call_operand.vmem [shape: f32[1,32], index: 8, kind: input, shape index: {}]
  %s9 = inlined_call_operand.vmem [shape: f32[1,32], index: 9, kind: input, shape index: {}]
  %s10 = inlined_call_operand.vmem [shape: f32[1,32], index: 10, kind: input, shape index: {}]
  %s11 = inlined_call_operand.hbm [shape: f32[32,64], index: 11, kind: input, shape index: {}]
  %s12 = inlined_call_operand.vmem [shape: f32[1,64], index: 12, kind: input, shape index: {}]
  %s13 = inlined_call_operand.vmem [shape: f32[64,32], index: 13, kind: input, shape index: {}]
  %s14 = inlined_call_operand.vmem [shape: f32[1,32], index: 14, kind: input, shape index: {}]
  %s15 = inlined_call_operand.vmem [shape: f32[1,32], index: 15, kind: input, shape index: {}]
  %s16 = inlined_call_operand.vmem [shape: f32[1,32], index: 16, kind: input, shape index: {}]
  %s17 = inlined_call_operand.hbm [shape: f32[16,32], index: 17, kind: output, shape index: {}]
  %s18 = sld [smem:[#allocation0]]
  $region90: #{tpu_custom_call.1} parent=0
    _
  %s20 = ssub.s32 1, %s18
  %s21 = scalar_select 0, %s20, %s18
  $region1: #{tpu_custom_call.1} parent=0
    #allocation4 [shape = 'u8[8192]{0}', space=vmem, size = 0x2000, scoped, tag = 'input window, operand 0, single buffered']
    #allocation5 [shape = 's32[1]{0}', space=sflag, size = 0x4, scoped, tag = 'scoped memory for tpu_custom_call.1']
    #allocation6 [shape = 's32[1]{0}', space=sflag, size = 0x4, scoped, tag = 'scoped memory for tpu_custom_call.1']
    #allocation7 [shape = 'u8[16384]{0}', space=vmem, size = 0x4000, scoped, tag = 'input window, operand 7, single buffered']
    #allocation8 [shape = 's32[1]{0}', space=sflag, size = 0x4, scoped, tag = 'scoped memory for tpu_custom_call.1']
    #allocation9 [shape = 'u8[16384]{0}', space=vmem, size = 0x4000, scoped, tag = 'input window, operand 11, single buffered']
    #allocation10 [shape = 'u8[8192]{0}', space=vmem, size = 0x2000, scoped, tag = 'output window, operand 0, single buffered']
    %22 = vsyncpa [#allocation5], 0
    %23 = vsyncpa [#allocation8], 0
    %24 = vsyncpa [#allocation6], 0
    // Predicated region
    $region2: #{tpu_custom_call.1} parent=1 // pred_check
      _
    $region3: #{tpu_custom_call.1} parent=1 // pred_check_branch
      %26 = sbr.rel (0) target = $region5
    $region4: #{tpu_custom_call.1} parent=1 // pred_region
      %s28 = ssub.s32 256, 256
      %29 = vsyncadd [#allocation5], %s28
      %s30 = sshll.u32 [#allocation4], 4
      %s31 = int_to_ptr.vmem [resolvable:$true] %s30
      %36 = dma.hbm_to_vmem [thread:$0]  %s0, 256, %s31, [#allocation5], 128, 128, 8
    $region5: #{tpu_custom_call.1} parent=1 // pred_fallthru
      _
    // Predicated region
    $region6: #{tpu_custom_call.1} parent=1 // pred_check
      _
    $region7: #{tpu_custom_call.1} parent=1 // pred_check_branch
      %38 = sbr.rel (0) target = $region9
    $region8: #{tpu_custom_call.1} parent=1 // pred_region
      _
    $region9: #{tpu_custom_call.1} parent=1 // pred_fallthru
      _
    // Predicated region
    $region10: #{tpu_custom_call.1} parent=1 // pred_check
      _
    $region11: #{tpu_custom_call.1} parent=1 // pred_check_branch
      %40 = sbr.rel (0) target = $region13
    $region12: #{tpu_custom_call.1} parent=1 // pred_region
      _
    $region13: #{tpu_custom_call.1} parent=1 // pred_fallthru
      _
    // Predicated region
    $region14: #{tpu_custom_call.1} parent=1 // pred_check
      _
    $region15: #{tpu_custom_call.1} parent=1 // pred_check_branch
      %42 = sbr.rel (0) target = $region17
    $region16: #{tpu_custom_call.1} parent=1 // pred_region
      _
    $region17: #{tpu_custom_call.1} parent=1 // pred_fallthru
      _
    // Predicated region
    $region18: #{tpu_custom_call.1} parent=1 // pred_check
      _
    $region19: #{tpu_custom_call.1} parent=1 // pred_check_branch
      %44 = sbr.rel (0) target = $region21
    $region20: #{tpu_custom_call.1} parent=1 // pred_region
      _
    $region21: #{tpu_custom_call.1} parent=1 // pred_fallthru
      _
    // Predicated region
    $region22: #{tpu_custom_call.1} parent=1 // pred_check
      _
    $region23: #{tpu_custom_call.1} parent=1 // pred_check_branch
      %46 = sbr.rel (0) target = $region25
    $region24: #{tpu_custom_call.1} parent=1 // pred_region
      _
    $region25: #{tpu_custom_call.1} parent=1 // pred_fallthru
      _
    // Predicated region
    $region26: #{tpu_custom_call.1} parent=1 // pred_check
      _
    $region27: #{tpu_custom_call.1} parent=1 // pred_check_branch
      %48 = sbr.rel (0) target = $region29
    $region28: #{tpu_custom_call.1} parent=1 // pred_region
      _
    $region29: #{tpu_custom_call.1} parent=1 // pred_fallthru
      _
    // Predicated region
    $region30: #{tpu_custom_call.1} parent=1 // pred_check
      _
    $region31: #{tpu_custom_call.1} parent=1 // pred_check_branch
      %50 = sbr.rel (0) target = $region33
    $region32: #{tpu_custom_call.1} parent=1 // pred_region
      %s52 = ssub.s32 512, 512
      %53 = vsyncadd [#allocation8], %s52
      %s54 = sshll.u32 [#allocation7], 4
      %s55 = int_to_ptr.vmem [resolvable:$true] %s54
      %60 = dma.hbm_to_vmem [thread:$0]  %s7, 512, %s55, [#allocation8], 128, 128, 8
    $region33: #{tpu_custom_call.1} parent=1 // pred_fallthru
      _
    // Predicated region
    $region34: #{tpu_custom_call.1} parent=1 // pred_check
      _
    $region35: #{tpu_custom_call.1} parent=1 // pred_check_branch
      %62 = sbr.rel (0) target = $region37
    $region36: #{tpu_custom_call.1} parent=1 // pred_region
      _
    $region37: #{tpu_custom_call.1} parent=1 // pred_fallthru
      _
    // Predicated region
    $region38: #{tpu_custom_call.1} parent=1 // pred_check
      _
    $region39: #{tpu_custom_call.1} parent=1 // pred_check_branch
      %64 = sbr.rel (0) target = $region41
    $region40: #{tpu_custom_call.1} parent=1 // pred_region
      _
    $region41: #{tpu_custom_call.1} parent=1 // pred_fallthru
      _
    // Predicated region
    $region42: #{tpu_custom_call.1} parent=1 // pred_check
      _
    $region43: #{tpu_custom_call.1} parent=1 // pred_check_branch
      %66 = sbr.rel (0) target = $region45
    $region44: #{tpu_custom_call.1} parent=1 // pred_region
      _
    $region45: #{tpu_custom_call.1} parent=1 // pred_fallthru
      _
    // Predicated region
    $region46: #{tpu_custom_call.1} parent=1 // pred_check
      _
    $region47: #{tpu_custom_call.1} parent=1 // pred_check_branch
      %68 = sbr.rel (0) target = $region49
    $region48: #{tpu_custom_call.1} parent=1 // pred_region
      %s70 = ssub.s32 512, 512
      %71 = vsyncadd [#allocation8], %s70
      %s72 = sshll.u32 [#allocation9], 4
      %s73 = int_to_ptr.vmem [resolvable:$true] %s72
      %78 = dma.hbm_to_vmem [thread:$0]  %s11, 512, %s73, [#allocation8], 128, 128, 8
    $region49: #{tpu_custom_call.1} parent=1 // pred_fallthru
      _
    // Predicated region
    $region50: #{tpu_custom_call.1} parent=1 // pred_check
      _
    $region51: #{tpu_custom_call.1} parent=1 // pred_check_branch
      %80 = sbr.rel (0) target = $region53
    $region52: #{tpu_custom_call.1} parent=1 // pred_region
      _
    $region53: #{tpu_custom_call.1} parent=1 // pred_fallthru
      _
    // Predicated region
    $region54: #{tpu_custom_call.1} parent=1 // pred_check
      _
    $region55: #{tpu_custom_call.1} parent=1 // pred_check_branch
      %82 = sbr.rel (0) target = $region57
    $region56: #{tpu_custom_call.1} parent=1 // pred_region
      _
    $region57: #{tpu_custom_call.1} parent=1 // pred_fallthru
      _
    // Predicated region
    $region58: #{tpu_custom_call.1} parent=1 // pred_check
      _
    $region59: #{tpu_custom_call.1} parent=1 // pred_check_branch
      %84 = sbr.rel (0) target = $region61
    $region60: #{tpu_custom_call.1} parent=1 // pred_region
      _
    $region61: #{tpu_custom_call.1} parent=1 // pred_fallthru
      _
    // Predicated region
    $region62: #{tpu_custom_call.1} parent=1 // pred_check
      _
    $region63: #{tpu_custom_call.1} parent=1 // pred_check_branch
      %86 = sbr.rel (0) target = $region65
    $region64: #{tpu_custom_call.1} parent=1 // pred_region
      _
    $region65: #{tpu_custom_call.1} parent=1 // pred_fallthru
      _
    // Predicated region
    $region66: #{tpu_custom_call.1} parent=1 // pred_check
      _
    $region67: #{tpu_custom_call.1} parent=1 // pred_check_branch
      %88 = sbr.rel (0) target = $region69
    $region68: #{tpu_custom_call.1} parent=1 // pred_region
      _
    $region69: #{tpu_custom_call.1} parent=1 // pred_fallthru
      _
    // Predicated region
    $region70: #{tpu_custom_call.1} parent=1 // pred_check
      _
    $region71: #{tpu_custom_call.1} parent=1 // pred_check_branch
      %90 = sbr.rel (0) target = $region73
    $region72: #{tpu_custom_call.1} parent=1 // pred_region
      %91 = dma.done [#allocation5], 256
    $region73: #{tpu_custom_call.1} parent=1 // pred_fallthru
      _
    // Predicated region
    $region74: #{tpu_custom_call.1} parent=1 // pred_check
      _
    $region75: #{tpu_custom_call.1} parent=1 // pred_check_branch
      %93 = sbr.rel (0) target = $region77
    $region76: #{tpu_custom_call.1} parent=1 // pred_region
      %94 = dma.done [#allocation8], 512
    $region77: #{tpu_custom_call.1} parent=1 // pred_fallthru
      _
    // Predicated region
    $region78: #{tpu_custom_call.1} parent=1 // pred_check
      _
    $region79: #{tpu_custom_call.1} parent=1 // pred_check_branch
      %96 = sbr.rel (0) target = $region81
    $region80: #{tpu_custom_call.1} parent=1 // pred_region
      %97 = dma.done [#allocation8], 512
    $region81: #{tpu_custom_call.1} parent=1 // pred_fallthru
      _
    %v98 = vld [vmem:[#allocation4] sm:$0xff]
    %v99 = vld [vmem:[#allocation4 + $0x8] sm:$0xff]
    %v100 = vld [vmem:[%s1] sm:$0xff]
    %v101 = vld [vmem:[%s1 + $0x8] sm:$0xff]
    %v102 = vld [vmem:[%s1 + $0x10] sm:$0xff]
    %v103 = vld [vmem:[%s1 + $0x18] sm:$0xff]
    %v104 = vld [vmem:[%s2] sm:$0x1]
    %v106 = vlaneseq
    %v107 = vshrl.u32 %v106, 7
    %v108 = vsub.s32 0, %v107
    %v109 = vrot.slane %v104, %v108
    %vm111 = vcmask 261120
    %v113 = vsel %vm111, %v98, 0
    %v116 = vsel %vm111, %v99, 0
    %118 = vmatprep.subr.mxu0 0.0
    %119 = vmatpush1.msra.mxu0 %v100
    %120 = vmatprep.subr.mxu0 0.0
    %121 = vmatpush1.msra.mxu0 %v101
    %122 = vmatprep.subr.mxu0 0.0
    %123 = vmatpush1.msra.mxu0 %v102
    %124 = vmatprep.subr.mxu0 0.0
    %125 = vmatpush1.msra.mxu0 %v103
    %126 = vmatprep.subr.mxu0 0.0
    %127 = vmatpush1.msra.mxu0 0.0
    %128 = vmatprep.subr.mxu0 0.0
    %129 = vmatpush1.msra.mxu0 0.0
    %130 = vmatprep.subr.mxu0 0.0
    %131 = vmatpush1.msra.mxu0 0.0
    %132 = vmatprep.subr.mxu0 0.0
    %133 = vmatpush1.msra.mxu0 0.0
    %134 = vmatprep.subr.mxu0 0.0
    %135 = vmatpush1.msra.mxu0 0.0
    %136 = vmatprep.subr.mxu0 0.0
    %137 = vmatpush1.msra.mxu0 0.0
    %138 = vmatprep.subr.mxu0 0.0
    %139 = vmatpush1.msra.mxu0 0.0
    %140 = vmatprep.subr.mxu0 0.0
    %141 = vmatpush1.msra.mxu0 0.0
    %142 = vmatprep.subr.mxu0 0.0
    %143 = vmatpush1.msra.mxu0 0.0
    %144 = vmatprep.subr.mxu0 0.0
    %145 = vmatpush1.msra.mxu0 0.0
    %146 = vmatprep.subr.mxu0 0.0
    %147 = vmatpush1.msra.mxu0 0.0
    %148 = vmatprep.subr.mxu0 0.0
    %149 = vmatpush1.msra.mxu0 0.0
    %150 = vmatprep.subr.mxu0 0.0
    %151 = vmatpush1.msra.mxu0 0.0
    %152 = vmatprep.subr.mxu0 0.0
    %153 = vmatpush1.msra.mxu0 0.0
    %154 = vmatprep.subr.mxu0 0.0
    %155 = vmatpush1.msra.mxu0 0.0
    %156 = vmatprep.subr.mxu0 0.0
    %157 = vmatpush1.msra.mxu0 0.0
    %158 = vmatprep.subr.mxu0 0.0
    %159 = vmatpush1.msra.mxu0 0.0
    %160 = vmatprep.subr.mxu0 0.0
    %161 = vmatpush1.msra.mxu0 0.0
    %162 = vmatprep.subr.mxu0 0.0
    %163 = vmatpush1.msra.mxu0 0.0
    %164 = vmatprep.subr.mxu0 0.0
    %165 = vmatpush1.msra.mxu0 0.0
    %166 = vmatprep.subr.mxu0 0.0
    %167 = vmatpush1.msra.mxu0 0.0
    %168 = vmatprep.subr.mxu0 0.0
    %169 = vmatpush1.msra.mxu0 0.0
    %170 = vmatprep.subr.mxu0 0.0
    %171 = vmatpush1.msra.mxu0 0.0
    %172 = vmatprep.subr.mxu0 0.0
    %173 = vmatpush1.msra.mxu0 0.0
    %174 = vmatprep.subr.mxu0 0.0
    %175 = vmatpush1.msra.mxu0 0.0
    %176 = vmatprep.subr.mxu0 0.0
    %177 = vmatpush1.msra.mxu0 0.0
    %178 = vmatprep.subr.mxu0 0.0
    %179 = vmatpush1.msra.mxu0 0.0
    %180 = vmatprep.subr.mxu0 0.0
    %181 = vmatpush1.msra.mxu0 0.0
    %182 = vmatprep.mubr.f32.mxu0 0.0
    %183 = vmatmul.mubr.f32.gmra.mrb[0].mxu0 %v113
    %v184 = vpop.f32.mrb[0].mxu0
    %v185 = vadd.f32 %v109, %v184
    %v186 = vpop.f32.mrb[0].mxu0
    %187 = vmatprep.mubr.f32.mxu0 0.0
    %188 = vmatmul.mubr.f32.gmra.mrb[0].mxu0 %v116
    %v189 = vpop.f32.mrb[0].mxu0
    %v190 = vadd.f32 %v109, %v189
    %v191 = vpop.f32.mrb[0].mxu0
    %192 = vdwg.mxu0
    %v193 = vmul.f32 %v185, 0.35355338
    %v194 = vmul.f32 %v190, 0.35355338
    %v195 = vld [vmem:[%s3] sm:$0xff]
    %v196 = vld [vmem:[%s3 + $0x8] sm:$0xff]
    %v197 = vld [vmem:[%s3 + $0x10] sm:$0xff]
    %v198 = vld [vmem:[%s3 + $0x18] sm:$0xff]
    %v199 = vld [vmem:[%s4] sm:$0x1]
    %v201 = vlaneseq
    %v202 = vshrl.u32 %v201, 7
    %v203 = vsub.s32 0, %v202
    %v204 = vrot.slane %v199, %v203
    %206 = vmatprep.subr.mxu0 0.0
    %207 = vmatpush1.msra.mxu0 %v195
    %208 = vmatprep.subr.mxu0 0.0
    %209 = vmatpush1.msra.mxu0 %v196
    %210 = vmatprep.subr.mxu0 0.0
    %211 = vmatpush1.msra.mxu0 %v197
    %212 = vmatprep.subr.mxu0 0.0
    %213 = vmatpush1.msra.mxu0 %v198
    %214 = vmatprep.subr.mxu0 0.0
    %215 = vmatpush1.msra.mxu0 0.0
    %216 = vmatprep.subr.mxu0 0.0
    %217 = vmatpush1.msra.mxu0 0.0
    %218 = vmatprep.subr.mxu0 0.0
    %219 = vmatpush1.msra.mxu0 0.0
    %220 = vmatprep.subr.mxu0 0.0
    %221 = vmatpush1.msra.mxu0 0.0
    %222 = vmatprep.subr.mxu0 0.0
    %223 = vmatpush1.msra.mxu0 0.0
    %224 = vmatprep.subr.mxu0 0.0
    %225 = vmatpush1.msra.mxu0 0.0
    %226 = vmatprep.subr.mxu0 0.0
    %227 = vmatpush1.msra.mxu0 0.0
    %228 = vmatprep.subr.mxu0 0.0
    %229 = vmatpush1.msra.mxu0 0.0
    %230 = vmatprep.subr.mxu0 0.0
    %231 = vmatpush1.msra.mxu0 0.0
    %232 = vmatprep.subr.mxu0 0.0
    %233 = vmatpush1.msra.mxu0 0.0
    %234 = vmatprep.subr.mxu0 0.0
    %235 = vmatpush1.msra.mxu0 0.0
    %236 = vmatprep.subr.mxu0 0.0
    %237 = vmatpush1.msra.mxu0 0.0
    %238 = vmatprep.subr.mxu0 0.0
    %239 = vmatpush1.msra.mxu0 0.0
    %240 = vmatprep.subr.mxu0 0.0
    %241 = vmatpush1.msra.mxu0 0.0
    %242 = vmatprep.subr.mxu0 0.0
    %243 = vmatpush1.msra.mxu0 0.0
    %244 = vmatprep.subr.mxu0 0.0
    %245 = vmatpush1.msra.mxu0 0.0
    %246 = vmatprep.subr.mxu0 0.0
    %247 = vmatpush1.msra.mxu0 0.0
    %248 = vmatprep.subr.mxu0 0.0
    %249 = vmatpush1.msra.mxu0 0.0
    %250 = vmatprep.subr.mxu0 0.0
    %251 = vmatpush1.msra.mxu0 0.0
    %252 = vmatprep.subr.mxu0 0.0
    %253 = vmatpush1.msra.mxu0 0.0
    %254 = vmatprep.subr.mxu0 0.0
    %255 = vmatpush1.msra.mxu0 0.0
    %256 = vmatprep.subr.mxu0 0.0
    %257 = vmatpush1.msra.mxu0 0.0
    %258 = vmatprep.subr.mxu0 0.0
    %259 = vmatpush1.msra.mxu0 0.0
    %260 = vmatprep.subr.mxu0 0.0
    %261 = vmatpush1.msra.mxu0 0.0
    %262 = vmatprep.subr.mxu0 0.0
    %263 = vmatpush1.msra.mxu0 0.0
    %264 = vmatprep.subr.mxu0 0.0
    %265 = vmatpush1.msra.mxu0 0.0
    %266 = vmatprep.subr.mxu0 0.0
    %267 = vmatpush1.msra.mxu0 0.0
    %268 = vmatprep.subr.mxu0 0.0
    %269 = vmatpush1.msra.mxu0 0.0
    %270 = vmatprep.mubr.f32.mxu0 0.0
    %271 = vmatmul.mubr.f32.gmra.mrb[0].mxu0 %v113
    %v272 = vpop.f32.mrb[0].mxu0
    %v273 = vadd.f32 %v204, %v272
    %v274 = vpop.f32.mrb[0].mxu0
    %275 = vmatprep.mubr.f32.mxu0 0.0
    %276 = vmatmul.mubr.f32.gmra.mrb[0].mxu0 %v116
    %v277 = vpop.f32.mrb[0].mxu0
    %v278 = vadd.f32 %v204, %v277
    %v279 = vpop.f32.mrb[0].mxu0
    %280 = vdwg.mxu0
    %v281 = vld [vmem:[%s5] sm:$0xff]
    %v282 = vld [vmem:[%s5 + $0x8] sm:$0xff]
    %v283 = vld [vmem:[%s5 + $0x10] sm:$0xff]
    %v284 = vld [vmem:[%s5 + $0x18] sm:$0xff]
    %v285 = vld [vmem:[%s6] sm:$0x1]
    %v287 = vlaneseq
    %v288 = vshrl.u32 %v287, 7
    %v289 = vsub.s32 0, %v288
    %v290 = vrot.slane %v285, %v289
    %292 = vmatprep.subr.mxu0 0.0
    %293 = vmatpush1.msra.mxu0 %v281
    %294 = vmatprep.subr.mxu0 0.0
    %295 = vmatpush1.msra.mxu0 %v282
    %296 = vmatprep.subr.mxu0 0.0
    %297 = vmatpush1.msra.mxu0 %v283
    %298 = vmatprep.subr.mxu0 0.0
    %299 = vmatpush1.msra.mxu0 %v284
    %300 = vmatprep.subr.mxu0 0.0
    %301 = vmatpush1.msra.mxu0 0.0
    %302 = vmatprep.subr.mxu0 0.0
    %303 = vmatpush1.msra.mxu0 0.0
    %304 = vmatprep.subr.mxu0 0.0
    %305 = vmatpush1.msra.mxu0 0.0
    %306 = vmatprep.subr.mxu0 0.0
    %307 = vmatpush1.msra.mxu0 0.0
    %308 = vmatprep.subr.mxu0 0.0
    %309 = vmatpush1.msra.mxu0 0.0
    %310 = vmatprep.subr.mxu0 0.0
    %311 = vmatpush1.msra.mxu0 0.0
    %312 = vmatprep.subr.mxu0 0.0
    %313 = vmatpush1.msra.mxu0 0.0
    %314 = vmatprep.subr.mxu0 0.0
    %315 = vmatpush1.msra.mxu0 0.0
    %316 = vmatprep.subr.mxu0 0.0
    %317 = vmatpush1.msra.mxu0 0.0
    %318 = vmatprep.subr.mxu0 0.0
    %319 = vmatpush1.msra.mxu0 0.0
    %320 = vmatprep.subr.mxu0 0.0
    %321 = vmatpush1.msra.mxu0 0.0
    %322 = vmatprep.subr.mxu0 0.0
    %323 = vmatpush1.msra.mxu0 0.0
    %324 = vmatprep.subr.mxu0 0.0
    %325 = vmatpush1.msra.mxu0 0.0
    %326 = vmatprep.subr.mxu0 0.0
    %327 = vmatpush1.msra.mxu0 0.0
    %328 = vmatprep.subr.mxu0 0.0
    %329 = vmatpush1.msra.mxu0 0.0
    %330 = vmatprep.subr.mxu0 0.0
    %331 = vmatpush1.msra.mxu0 0.0
    %332 = vmatprep.subr.mxu0 0.0
    %333 = vmatpush1.msra.mxu0 0.0
    %334 = vmatprep.subr.mxu0 0.0
    %335 = vmatpush1.msra.mxu0 0.0
    %336 = vmatprep.subr.mxu0 0.0
    %337 = vmatpush1.msra.mxu0 0.0
    %338 = vmatprep.subr.mxu0 0.0
    %339 = vmatpush1.msra.mxu0 0.0
    %340 = vmatprep.subr.mxu0 0.0
    %341 = vmatpush1.msra.mxu0 0.0
    %342 = vmatprep.subr.mxu0 0.0
    %343 = vmatpush1.msra.mxu0 0.0
    %344 = vmatprep.subr.mxu0 0.0
    %345 = vmatpush1.msra.mxu0 0.0
    %346 = vmatprep.subr.mxu0 0.0
    %347 = vmatpush1.msra.mxu0 0.0
    %348 = vmatprep.subr.mxu0 0.0
    %349 = vmatpush1.msra.mxu0 0.0
    %350 = vmatprep.subr.mxu0 0.0
    %351 = vmatpush1.msra.mxu0 0.0
    %352 = vmatprep.subr.mxu0 0.0
    %353 = vmatpush1.msra.mxu0 0.0
    %354 = vmatprep.subr.mxu0 0.0
    %355 = vmatpush1.msra.mxu0 0.0
    %356 = vmatprep.mubr.f32.mxu0 0.0
    %357 = vmatmul.mubr.f32.gmra.mrb[0].mxu0 %v113
    %v358 = vpop.f32.mrb[0].mxu0
    %v359 = vadd.f32 %v290, %v358
    %v360 = vpop.f32.mrb[0].mxu0
    %361 = vmatprep.mubr.f32.mxu0 0.0
    %362 = vmatmul.mubr.f32.gmra.mrb[0].mxu0 %v116
    %v363 = vpop.f32.mrb[0].mxu0
    %v364 = vadd.f32 %v290, %v363
    %v365 = vpop.f32.mrb[0].mxu0
    %366 = vdwg.mxu0
    %vm367 = vcmask 64512
    %v369 = vsel %vm367, %v193, 0
    %v372 = vsel %vm367, %v273, 0
    %374 = vmatprep.subr.mxu0 0.0
    %375 = vmatpush1.xpose.msra.mxu0 %v372
    %376 = vmatprep.subr.mxu0 0.0
    %377 = vmatpush1.xpose.msra.mxu0 0.0
    %378 = vmatprep.subr.mxu0 0.0
    %379 = vmatpush1.xpose.msra.mxu0 0.0
    %380 = vmatprep.subr.mxu0 0.0
    %381 = vmatpush1.xpose.msra.mxu0 0.0
    %382 = vmatprep.subr.mxu0 0.0
    %383 = vmatpush1.xpose.msra.mxu0 0.0
    %384 = vmatprep.subr.mxu0 0.0
    %385 = vmatpush1.xpose.msra.mxu0 0.0
    %386 = vmatprep.subr.mxu0 0.0
    %387 = vmatpush1.xpose.msra.mxu0 0.0
    %388 = vmatprep.subr.mxu0 0.0
    %389 = vmatpush1.xpose.msra.mxu0 0.0
    %390 = vmatprep.subr.mxu0 0.0
    %391 = vmatpush1.xpose.msra.mxu0 0.0
    %392 = vmatprep.subr.mxu0 0.0
    %393 = vmatpush1.xpose.msra.mxu0 0.0
    %394 = vmatprep.subr.mxu0 0.0
    %395 = vmatpush1.xpose.msra.mxu0 0.0
    %396 = vmatprep.subr.mxu0 0.0
    %397 = vmatpush1.xpose.msra.mxu0 0.0
    %398 = vmatprep.subr.mxu0 0.0
    %399 = vmatpush1.xpose.msra.mxu0 0.0
    %400 = vmatprep.subr.mxu0 0.0
    %401 = vmatpush1.xpose.msra.mxu0 0.0
    %402 = vmatprep.subr.mxu0 0.0
    %403 = vmatpush1.xpose.msra.mxu0 0.0
    %404 = vmatprep.subr.mxu0 0.0
    %405 = vmatpush1.xpose.msra.mxu0 0.0
    %406 = vmatprep.subr.mxu0 0.0
    %407 = vmatpush1.xpose.msra.mxu0 0.0
    %408 = vmatprep.subr.mxu0 0.0
    %409 = vmatpush1.xpose.msra.mxu0 0.0
    %410 = vmatprep.subr.mxu0 0.0
    %411 = vmatpush1.xpose.msra.mxu0 0.0
    %412 = vmatprep.subr.mxu0 0.0
    %413 = vmatpush1.xpose.msra.mxu0 0.0
    %414 = vmatprep.subr.mxu0 0.0
    %415 = vmatpush1.xpose.msra.mxu0 0.0
    %416 = vmatprep.subr.mxu0 0.0
    %417 = vmatpush1.xpose.msra.mxu0 0.0
    %418 = vmatprep.subr.mxu0 0.0
    %419 = vmatpush1.xpose.msra.mxu0 0.0
    %420 = vmatprep.subr.mxu0 0.0
    %421 = vmatpush1.xpose.msra.mxu0 0.0
    %422 = vmatprep.subr.mxu0 0.0
    %423 = vmatpush1.xpose.msra.mxu0 0.0
    %424 = vmatprep.subr.mxu0 0.0
    %425 = vmatpush1.xpose.msra.mxu0 0.0
    %426 = vmatprep.subr.mxu0 0.0
    %427 = vmatpush1.xpose.msra.mxu0 0.0
    %428 = vmatprep.subr.mxu0 0.0
    %429 = vmatpush1.xpose.msra.mxu0 0.0
    %430 = vmatprep.subr.mxu0 0.0
    %431 = vmatpush1.xpose.msra.mxu0 0.0
    %432 = vmatprep.subr.mxu0 0.0
    %433 = vmatpush1.xpose.msra.mxu0 0.0
    %434 = vmatprep.subr.mxu0 0.0
    %435 = vmatpush1.xpose.msra.mxu0 0.0
    %436 = vmatprep.subr.mxu0 0.0
    %437 = vmatpush1.xpose.msra.mxu0 0.0
    %438 = vmatprep.mubr.f32.mxu0 0.0
    %439 = vmatmul.mubr.f32.gmra.mrb[0].mxu0 %v369
    %v440 = vpop.f32.mrb[0].mxu0
    %v441 = vadd.f32 0.0, %v440
    %v442 = vpop.f32.mrb[0].mxu0
    %443 = vdwg.mxu0
    %v445 = vsel %vm367, %v194, 0
    %v448 = vsel %vm367, %v278, 0
    %450 = vmatprep.subr.mxu0 0.0
    %451 = vmatpush1.xpose.msra.mxu0 %v448
    %452 = vmatprep.subr.mxu0 0.0
    %453 = vmatpush1.xpose.msra.mxu0 0.0
    %454 = vmatprep.subr.mxu0 0.0
    %455 = vmatpush1.xpose.msra.mxu0 0.0
    %456 = vmatprep.subr.mxu0 0.0
    %457 = vmatpush1.xpose.msra.mxu0 0.0
    %458 = vmatprep.subr.mxu0 0.0
    %459 = vmatpush1.xpose.msra.mxu0 0.0
    %460 = vmatprep.subr.mxu0 0.0
    %461 = vmatpush1.xpose.msra.mxu0 0.0
    %462 = vmatprep.subr.mxu0 0.0
    %463 = vmatpush1.xpose.msra.mxu0 0.0
    %464 = vmatprep.subr.mxu0 0.0
    %465 = vmatpush1.xpose.msra.mxu0 0.0
    %466 = vmatprep.subr.mxu0 0.0
    %467 = vmatpush1.xpose.msra.mxu0 0.0
    %468 = vmatprep.subr.mxu0 0.0
    %469 = vmatpush1.xpose.msra.mxu0 0.0
    %470 = vmatprep.subr.mxu0 0.0
    %471 = vmatpush1.xpose.msra.mxu0 0.0
    %472 = vmatprep.subr.mxu0 0.0
    %473 = vmatpush1.xpose.msra.mxu0 0.0
    %474 = vmatprep.subr.mxu0 0.0
    %475 = vmatpush1.xpose.msra.mxu0 0.0
    %476 = vmatprep.subr.mxu0 0.0
    %477 = vmatpush1.xpose.msra.mxu0 0.0
    %478 = vmatprep.subr.mxu0 0.0
    %479 = vmatpush1.xpose.msra.mxu0 0.0
    %480 = vmatprep.subr.mxu0 0.0
    %481 = vmatpush1.xpose.msra.mxu0 0.0
    %482 = vmatprep.subr.mxu0 0.0
    %483 = vmatpush1.xpose.msra.mxu0 0.0
    %484 = vmatprep.subr.mxu0 0.0
    %485 = vmatpush1.xpose.msra.mxu0 0.0
    %486 = vmatprep.subr.mxu0 0.0
    %487 = vmatpush1.xpose.msra.mxu0 0.0
    %488 = vmatprep.subr.mxu0 0.0
    %489 = vmatpush1.xpose.msra.mxu0 0.0
    %490 = vmatprep.subr.mxu0 0.0
    %491 = vmatpush1.xpose.msra.mxu0 0.0
    %492 = vmatprep.subr.mxu0 0.0
    %493 = vmatpush1.xpose.msra.mxu0 0.0
    %494 = vmatprep.subr.mxu0 0.0
    %495 = vmatpush1.xpose.msra.mxu0 0.0
    %496 = vmatprep.subr.mxu0 0.0
    %497 = vmatpush1.xpose.msra.mxu0 0.0
    %498 = vmatprep.subr.mxu0 0.0
    %499 = vmatpush1.xpose.msra.mxu0 0.0
    %500 = vmatprep.subr.mxu0 0.0
    %501 = vmatpush1.xpose.msra.mxu0 0.0
    %502 = vmatprep.subr.mxu0 0.0
    %503 = vmatpush1.xpose.msra.mxu0 0.0
    %504 = vmatprep.subr.mxu0 0.0
    %505 = vmatpush1.xpose.msra.mxu0 0.0
    %506 = vmatprep.subr.mxu0 0.0
    %507 = vmatpush1.xpose.msra.mxu0 0.0
    %508 = vmatprep.subr.mxu0 0.0
    %509 = vmatpush1.xpose.msra.mxu0 0.0
    %510 = vmatprep.subr.mxu0 0.0
    %511 = vmatpush1.xpose.msra.mxu0 0.0
    %512 = vmatprep.subr.mxu0 0.0
    %513 = vmatpush1.xpose.msra.mxu0 0.0
    %514 = vmatprep.mubr.f32.mxu0 0.0
    %515 = vmatmul.mubr.f32.gmra.mrb[0].mxu0 %v445
    %v516 = vpop.f32.mrb[0].mxu0
    %v517 = vadd.f32 0.0, %v516
    %v518 = vpop.f32.mrb[0].mxu0
    %519 = vdwg.mxu0
    %520 = vst.msk [vmem:[#allocation2] sm:$0xff] %vm367, %v441
    %521 = vst.msk [vmem:[#allocation2 + $0x8] sm:$0xff] %vm367, %v517
    %522 = vrot.lane.b32.xlu0 %v193, 120
    %v523 = vpop.permute.xlu0 %522
    %524 = vrot.lane.b32.xlu0 %v273, 120
    %v525 = vpop.permute.xlu0 %524
    %v526 = vsel %vm367, %v523, 0
    %v528 = vsel %vm367, %v525, 0
    %530 = vmatprep.subr.mxu0 0.0
    %531 = vmatpush1.xpose.msra.mxu0 %v528
    %532 = vmatprep.subr.mxu0 0.0
    %533 = vmatpush1.xpose.msra.mxu0 0.0
    %534 = vmatprep.subr.mxu0 0.0
    %535 = vmatpush1.xpose.msra.mxu0 0.0
    %536 = vmatprep.subr.mxu0 0.0
    %537 = vmatpush1.xpose.msra.mxu0 0.0
    %538 = vmatprep.subr.mxu0 0.0
    %539 = vmatpush1.xpose.msra.mxu0 0.0
    %540 = vmatprep.subr.mxu0 0.0
    %541 = vmatpush1.xpose.msra.mxu0 0.0
    %542 = vmatprep.subr.mxu0 0.0
    %543 = vmatpush1.xpose.msra.mxu0 0.0
    %544 = vmatprep.subr.mxu0 0.0
    %545 = vmatpush1.xpose.msra.mxu0 0.0
    %546 = vmatprep.subr.mxu0 0.0
    %547 = vmatpush1.xpose.msra.mxu0 0.0
    %548 = vmatprep.subr.mxu0 0.0
    %549 = vmatpush1.xpose.msra.mxu0 0.0
    %550 = vmatprep.subr.mxu0 0.0
    %551 = vmatpush1.xpose.msra.mxu0 0.0
    %552 = vmatprep.subr.mxu0 0.0
    %553 = vmatpush1.xpose.msra.mxu0 0.0
    %554 = vmatprep.subr.mxu0 0.0
    %555 = vmatpush1.xpose.msra.mxu0 0.0
    %556 = vmatprep.subr.mxu0 0.0
    %557 = vmatpush1.xpose.msra.mxu0 0.0
    %558 = vmatprep.subr.mxu0 0.0
    %559 = vmatpush1.xpose.msra.mxu0 0.0
    %560 = vmatprep.subr.mxu0 0.0
    %561 = vmatpush1.xpose.msra.mxu0 0.0
    %562 = vmatprep.subr.mxu0 0.0
    %563 = vmatpush1.xpose.msra.mxu0 0.0
    %564 = vmatprep.subr.mxu0 0.0
    %565 = vmatpush1.xpose.msra.mxu0 0.0
    %566 = vmatprep.subr.mxu0 0.0
    %567 = vmatpush1.xpose.msra.mxu0 0.0
    %568 = vmatprep.subr.mxu0 0.0
    %569 = vmatpush1.xpose.msra.mxu0 0.0
    %570 = vmatprep.subr.mxu0 0.0
    %571 = vmatpush1.xpose.msra.mxu0 0.0
    %572 = vmatprep.subr.mxu0 0.0
    %573 = vmatpush1.xpose.msra.mxu0 0.0
    %574 = vmatprep.subr.mxu0 0.0
    %575 = vmatpush1.xpose.msra.mxu0 0.0
    %576 = vmatprep.subr.mxu0 0.0
    %577 = vmatpush1.xpose.msra.mxu0 0.0
    %578 = vmatprep.subr.mxu0 0.0
    %579 = vmatpush1.xpose.msra.mxu0 0.0
    %580 = vmatprep.subr.mxu0 0.0
    %581 = vmatpush1.xpose.msra.mxu0 0.0
    %582 = vmatprep.subr.mxu0 0.0
    %583 = vmatpush1.xpose.msra.mxu0 0.0
    %584 = vmatprep.subr.mxu0 0.0
    %585 = vmatpush1.xpose.msra.mxu0 0.0
    %586 = vmatprep.subr.mxu0 0.0
    %587 = vmatpush1.xpose.msra.mxu0 0.0
    %588 = vmatprep.subr.mxu0 0.0
    %589 = vmatpush1.xpose.msra.mxu0 0.0
    %590 = vmatprep.subr.mxu0 0.0
    %591 = vmatpush1.xpose.msra.mxu0 0.0
    %592 = vmatprep.subr.mxu0 0.0
    %593 = vmatpush1.xpose.msra.mxu0 0.0
    %594 = vmatprep.mubr.f32.mxu0 0.0
    %595 = vmatmul.mubr.f32.gmra.mrb[0].mxu0 %v526
    %v596 = vpop.f32.mrb[0].mxu0
    %v597 = vadd.f32 0.0, %v596
    %v598 = vpop.f32.mrb[0].mxu0
    %599 = vdwg.mxu0
    %600 = vrot.lane.b32.xlu0 %v194, 120
    %v601 = vpop.permute.xlu0 %600
    %602 = vrot.lane.b32.xlu0 %v278, 120
    %v603 = vpop.permute.xlu0 %602
    %v604 = vsel %vm367, %v601, 0
    %v606 = vsel %vm367, %v603, 0
    %608 = vmatprep.subr.mxu0 0.0
    %609 = vmatpush1.xpose.msra.mxu0 %v606
    %610 = vmatprep.subr.mxu0 0.0
    %611 = vmatpush1.xpose.msra.mxu0 0.0
    %612 = vmatprep.subr.mxu0 0.0
    %613 = vmatpush1.xpose.msra.mxu0 0.0
    %614 = vmatprep.subr.mxu0 0.0
    %615 = vmatpush1.xpose.msra.mxu0 0.0
    %616 = vmatprep.subr.mxu0 0.0
    %617 = vmatpush1.xpose.msra.mxu0 0.0
    %618 = vmatprep.subr.mxu0 0.0
    %619 = vmatpush1.xpose.msra.mxu0 0.0
    %620 = vmatprep.subr.mxu0 0.0
    %621 = vmatpush1.xpose.msra.mxu0 0.0
    %622 = vmatprep.subr.mxu0 0.0
    %623 = vmatpush1.xpose.msra.mxu0 0.0
    %624 = vmatprep.subr.mxu0 0.0
    %625 = vmatpush1.xpose.msra.mxu0 0.0
    %626 = vmatprep.subr.mxu0 0.0
    %627 = vmatpush1.xpose.msra.mxu0 0.0
    %628 = vmatprep.subr.mxu0 0.0
    %629 = vmatpush1.xpose.msra.mxu0 0.0
    %630 = vmatprep.subr.mxu0 0.0
    %631 = vmatpush1.xpose.msra.mxu0 0.0
    %632 = vmatprep.subr.mxu0 0.0
    %633 = vmatpush1.xpose.msra.mxu0 0.0
    %634 = vmatprep.subr.mxu0 0.0
    %635 = vmatpush1.xpose.msra.mxu0 0.0
    %636 = vmatprep.subr.mxu0 0.0
    %637 = vmatpush1.xpose.msra.mxu0 0.0
    %638 = vmatprep.subr.mxu0 0.0
    %639 = vmatpush1.xpose.msra.mxu0 0.0
    %640 = vmatprep.subr.mxu0 0.0
    %641 = vmatpush1.xpose.msra.mxu0 0.0
    %642 = vmatprep.subr.mxu0 0.0
    %643 = vmatpush1.xpose.msra.mxu0 0.0
    %644 = vmatprep.subr.mxu0 0.0
    %645 = vmatpush1.xpose.msra.mxu0 0.0
    %646 = vmatprep.subr.mxu0 0.0
    %647 = vmatpush1.xpose.msra.mxu0 0.0
    %648 = vmatprep.subr.mxu0 0.0
    %649 = vmatpush1.xpose.msra.mxu0 0.0
    %650 = vmatprep.subr.mxu0 0.0
    %651 = vmatpush1.xpose.msra.mxu0 0.0
    %652 = vmatprep.subr.mxu0 0.0
    %653 = vmatpush1.xpose.msra.mxu0 0.0
    %654 = vmatprep.subr.mxu0 0.0
    %655 = vmatpush1.xpose.msra.mxu0 0.0
    %656 = vmatprep.subr.mxu0 0.0
    %657 = vmatpush1.xpose.msra.mxu0 0.0
    %658 = vmatprep.subr.mxu0 0.0
    %659 = vmatpush1.xpose.msra.mxu0 0.0
    %660 = vmatprep.subr.mxu0 0.0
    %661 = vmatpush1.xpose.msra.mxu0 0.0
    %662 = vmatprep.subr.mxu0 0.0
    %663 = vmatpush1.xpose.msra.mxu0 0.0
    %664 = vmatprep.subr.mxu0 0.0
    %665 = vmatpush1.xpose.msra.mxu0 0.0
    %666 = vmatprep.subr.mxu0 0.0
    %667 = vmatpush1.xpose.msra.mxu0 0.0
    %668 = vmatprep.subr.mxu0 0.0
    %669 = vmatpush1.xpose.msra.mxu0 0.0
    %670 = vmatprep.subr.mxu0 0.0
    %671 = vmatpush1.xpose.msra.mxu0 0.0
    %672 = vmatprep.mubr.f32.mxu0 0.0
    %673 = vmatmul.mubr.f32.gmra.mrb[0].mxu0 %v604
    %v674 = vpop.f32.mrb[0].mxu0
    %v675 = vadd.f32 0.0, %v674
    %v676 = vpop.f32.mrb[0].mxu0
    %677 = vdwg.mxu0
    %678 = vst.msk [vmem:[#allocation2 + $0x10] sm:$0xff] %vm367, %v597
    %679 = vst.msk [vmem:[#allocation2 + $0x18] sm:$0xff] %vm367, %v675
    %680 = vrot.lane.b32.xlu0 %v193, 112
    %v681 = vpop.permute.xlu0 %680
    %682 = vrot.lane.b32.xlu0 %v273, 112
    %v683 = vpop.permute.xlu0 %682
    %v684 = vsel %vm367, %v681, 0
    %v686 = vsel %vm367, %v683, 0
    %688 = vmatprep.subr.mxu0 0.0
    %689 = vmatpush1.xpose.msra.mxu0 %v686
    %690 = vmatprep.subr.mxu0 0.0
    %691 = vmatpush1.xpose.msra.mxu0 0.0
    %692 = vmatprep.subr.mxu0 0.0
    %693 = vmatpush1.xpose.msra.mxu0 0.0
    %694 = vmatprep.subr.mxu0 0.0
    %695 = vmatpush1.xpose.msra.mxu0 0.0
    %696 = vmatprep.subr.mxu0 0.0
    %697 = vmatpush1.xpose.msra.mxu0 0.0
    %698 = vmatprep.subr.mxu0 0.0
    %699 = vmatpush1.xpose.msra.mxu0 0.0
    %700 = vmatprep.subr.mxu0 0.0
    %701 = vmatpush1.xpose.msra.mxu0 0.0
    %702 = vmatprep.subr.mxu0 0.0
    %703 = vmatpush1.xpose.msra.mxu0 0.0
    %704 = vmatprep.subr.mxu0 0.0
    %705 = vmatpush1.xpose.msra.mxu0 0.0
    %706 = vmatprep.subr.mxu0 0.0
    %707 = vmatpush1.xpose.msra.mxu0 0.0
    %708 = vmatprep.subr.mxu0 0.0
    %709 = vmatpush1.xpose.msra.mxu0 0.0
    %710 = vmatprep.subr.mxu0 0.0
    %711 = vmatpush1.xpose.msra.mxu0 0.0
    %712 = vmatprep.subr.mxu0 0.0
    %713 = vmatpush1.xpose.msra.mxu0 0.0
    %714 = vmatprep.subr.mxu0 0.0
    %715 = vmatpush1.xpose.msra.mxu0 0.0
    %716 = vmatprep.subr.mxu0 0.0
    %717 = vmatpush1.xpose.msra.mxu0 0.0
    %718 = vmatprep.subr.mxu0 0.0
    %719 = vmatpush1.xpose.msra.mxu0 0.0
    %720 = vmatprep.subr.mxu0 0.0
    %721 = vmatpush1.xpose.msra.mxu0 0.0
    %722 = vmatprep.subr.mxu0 0.0
    %723 = vmatpush1.xpose.msra.mxu0 0.0
    %724 = vmatprep.subr.mxu0 0.0
    %725 = vmatpush1.xpose.msra.mxu0 0.0
    %726 = vmatprep.subr.mxu0 0.0
    %727 = vmatpush1.xpose.msra.mxu0 0.0
    %728 = vmatprep.subr.mxu0 0.0
    %729 = vmatpush1.xpose.msra.mxu0 0.0
    %730 = vmatprep.subr.mxu0 0.0
    %731 = vmatpush1.xpose.msra.mxu0 0.0
    %732 = vmatprep.subr.mxu0 0.0
    %733 = vmatpush1.xpose.msra.mxu0 0.0
    %734 = vmatprep.subr.mxu0 0.0
    %735 = vmatpush1.xpose.msra.mxu0 0.0
    %736 = vmatprep.subr.mxu0 0.0
    %737 = vmatpush1.xpose.msra.mxu0 0.0
    %738 = vmatprep.subr.mxu0 0.0
    %739 = vmatpush1.xpose.msra.mxu0 0.0
    %740 = vmatprep.subr.mxu0 0.0
    %741 = vmatpush1.xpose.msra.mxu0 0.0
    %742 = vmatprep.subr.mxu0 0.0
    %743 = vmatpush1.xpose.msra.mxu0 0.0
    %744 = vmatprep.subr.mxu0 0.0
    %745 = vmatpush1.xpose.msra.mxu0 0.0
    %746 = vmatprep.subr.mxu0 0.0
    %747 = vmatpush1.xpose.msra.mxu0 0.0
    %748 = vmatprep.subr.mxu0 0.0
    %749 = vmatpush1.xpose.msra.mxu0 0.0
    %750 = vmatprep.subr.mxu0 0.0
    %751 = vmatpush1.xpose.msra.mxu0 0.0
    %752 = vmatprep.mubr.f32.mxu0 0.0
    %753 = vmatmul.mubr.f32.gmra.mrb[0].mxu0 %v684
    %v754 = vpop.f32.mrb[0].mxu0
    %v755 = vadd.f32 0.0, %v754
    %v756 = vpop.f32.mrb[0].mxu0
    %757 = vdwg.mxu0
    %758 = vrot.lane.b32.xlu0 %v194, 112
    %v759 = vpop.permute.xlu0 %758
    %760 = vrot.lane.b32.xlu0 %v278, 112
    %v761 = vpop.permute.xlu0 %760
    %v762 = vsel %vm367, %v759, 0
    %v764 = vsel %vm367, %v761, 0
    %766 = vmatprep.subr.mxu0 0.0
    %767 = vmatpush1.xpose.msra.mxu0 %v764
    %768 = vmatprep.subr.mxu0 0.0
    %769 = vmatpush1.xpose.msra.mxu0 0.0
    %770 = vmatprep.subr.mxu0 0.0
    %771 = vmatpush1.xpose.msra.mxu0 0.0
    %772 = vmatprep.subr.mxu0 0.0
    %773 = vmatpush1.xpose.msra.mxu0 0.0
    %774 = vmatprep.subr.mxu0 0.0
    %775 = vmatpush1.xpose.msra.mxu0 0.0
    %776 = vmatprep.subr.mxu0 0.0
    %777 = vmatpush1.xpose.msra.mxu0 0.0
    %778 = vmatprep.subr.mxu0 0.0
    %779 = vmatpush1.xpose.msra.mxu0 0.0
    %780 = vmatprep.subr.mxu0 0.0
    %781 = vmatpush1.xpose.msra.mxu0 0.0
    %782 = vmatprep.subr.mxu0 0.0
    %783 = vmatpush1.xpose.msra.mxu0 0.0
    %784 = vmatprep.subr.mxu0 0.0
    %785 = vmatpush1.xpose.msra.mxu0 0.0
    %786 = vmatprep.subr.mxu0 0.0
    %787 = vmatpush1.xpose.msra.mxu0 0.0
    %788 = vmatprep.subr.mxu0 0.0
    %789 = vmatpush1.xpose.msra.mxu0 0.0
    %790 = vmatprep.subr.mxu0 0.0
    %791 = vmatpush1.xpose.msra.mxu0 0.0
    %792 = vmatprep.subr.mxu0 0.0
    %793 = vmatpush1.xpose.msra.mxu0 0.0
    %794 = vmatprep.subr.mxu0 0.0
    %795 = vmatpush1.xpose.msra.mxu0 0.0
    %796 = vmatprep.subr.mxu0 0.0
    %797 = vmatpush1.xpose.msra.mxu0 0.0
    %798 = vmatprep.subr.mxu0 0.0
    %799 = vmatpush1.xpose.msra.mxu0 0.0
    %800 = vmatprep.subr.mxu0 0.0
    %801 = vmatpush1.xpose.msra.mxu0 0.0
    %802 = vmatprep.subr.mxu0 0.0
    %803 = vmatpush1.xpose.msra.mxu0 0.0
    %804 = vmatprep.subr.mxu0 0.0
    %805 = vmatpush1.xpose.msra.mxu0 0.0
    %806 = vmatprep.subr.mxu0 0.0
    %807 = vmatpush1.xpose.msra.mxu0 0.0
    %808 = vmatprep.subr.mxu0 0.0
    %809 = vmatpush1.xpose.msra.mxu0 0.0
    %810 = vmatprep.subr.mxu0 0.0
    %811 = vmatpush1.xpose.msra.mxu0 0.0
    %812 = vmatprep.subr.mxu0 0.0
    %813 = vmatpush1.xpose.msra.mxu0 0.0
    %814 = vmatprep.subr.mxu0 0.0
    %815 = vmatpush1.xpose.msra.mxu0 0.0
    %816 = vmatprep.subr.mxu0 0.0
    %817 = vmatpush1.xpose.msra.mxu0 0.0
    %818 = vmatprep.subr.mxu0 0.0
    %819 = vmatpush1.xpose.msra.mxu0 0.0
    %820 = vmatprep.subr.mxu0 0.0
    %821 = vmatpush1.xpose.msra.mxu0 0.0
    %822 = vmatprep.subr.mxu0 0.0
    %823 = vmatpush1.xpose.msra.mxu0 0.0
    %824 = vmatprep.subr.mxu0 0.0
    %825 = vmatpush1.xpose.msra.mxu0 0.0
    %826 = vmatprep.subr.mxu0 0.0
    %827 = vmatpush1.xpose.msra.mxu0 0.0
    %828 = vmatprep.subr.mxu0 0.0
    %829 = vmatpush1.xpose.msra.mxu0 0.0
    %830 = vmatprep.mubr.f32.mxu0 0.0
    %831 = vmatmul.mubr.f32.gmra.mrb[0].mxu0 %v762
    %v832 = vpop.f32.mrb[0].mxu0
    %v833 = vadd.f32 0.0, %v832
    %v834 = vpop.f32.mrb[0].mxu0
    %835 = vdwg.mxu0
    %836 = vst.msk [vmem:[#allocation2 + $0x20] sm:$0xff] %vm367, %v755
    %837 = vst.msk [vmem:[#allocation2 + $0x28] sm:$0xff] %vm367, %v833
    %838 = vrot.lane.b32.xlu0 %v193, 104
    %v839 = vpop.permute.xlu0 %838
    %840 = vrot.lane.b32.xlu0 %v273, 104
    %v841 = vpop.permute.xlu0 %840
    %v842 = vsel %vm367, %v839, 0
    %v844 = vsel %vm367, %v841, 0
    %846 = vmatprep.subr.mxu0 0.0
    %847 = vmatpush1.xpose.msra.mxu0 %v844
    %848 = vmatprep.subr.mxu0 0.0
    %849 = vmatpush1.xpose.msra.mxu0 0.0
    %850 = vmatprep.subr.mxu0 0.0
    %851 = vmatpush1.xpose.msra.mxu0 0.0
    %852 = vmatprep.subr.mxu0 0.0
    %853 = vmatpush1.xpose.msra.mxu0 0.0
    %854 = vmatprep.subr.mxu0 0.0
    %855 = vmatpush1.xpose.msra.mxu0 0.0
    %856 = vmatprep.subr.mxu0 0.0
    %857 = vmatpush1.xpose.msra.mxu0 0.0
    %858 = vmatprep.subr.mxu0 0.0
    %859 = vmatpush1.xpose.msra.mxu0 0.0
    %860 = vmatprep.subr.mxu0 0.0
    %861 = vmatpush1.xpose.msra.mxu0 0.0
    %862 = vmatprep.subr.mxu0 0.0
    %863 = vmatpush1.xpose.msra.mxu0 0.0
    %864 = vmatprep.subr.mxu0 0.0
    %865 = vmatpush1.xpose.msra.mxu0 0.0
    %866 = vmatprep.subr.mxu0 0.0
    %867 = vmatpush1.xpose.msra.mxu0 0.0
    %868 = vmatprep.subr.mxu0 0.0
    %869 = vmatpush1.xpose.msra.mxu0 0.0
    %870 = vmatprep.subr.mxu0 0.0
    %871 = vmatpush1.xpose.msra.mxu0 0.0
    %872 = vmatprep.subr.mxu0 0.0
    %873 = vmatpush1.xpose.msra.mxu0 0.0
    %874 = vmatprep.subr.mxu0 0.0
    %875 = vmatpush1.xpose.msra.mxu0 0.0
    %876 = vmatprep.subr.mxu0 0.0
    %877 = vmatpush1.xpose.msra.mxu0 0.0
    %878 = vmatprep.subr.mxu0 0.0
    %879 = vmatpush1.xpose.msra.mxu0 0.0
    %880 = vmatprep.subr.mxu0 0.0
    %881 = vmatpush1.xpose.msra.mxu0 0.0
    %882 = vmatprep.subr.mxu0 0.0
    %883 = vmatpush1.xpose.msra.mxu0 0.0
    %884 = vmatprep.subr.mxu0 0.0
    %885 = vmatpush1.xpose.msra.mxu0 0.0
    %886 = vmatprep.subr.mxu0 0.0
    %887 = vmatpush1.xpose.msra.mxu0 0.0
    %888 = vmatprep.subr.mxu0 0.0
    %889 = vmatpush1.xpose.msra.mxu0 0.0
    %890 = vmatprep.subr.mxu0 0.0
    %891 = vmatpush1.xpose.msra.mxu0 0.0
    %892 = vmatprep.subr.mxu0 0.0
    %893 = vmatpush1.xpose.msra.mxu0 0.0
    %894 = vmatprep.subr.mxu0 0.0
    %895 = vmatpush1.xpose.msra.mxu0 0.0
    %896 = vmatprep.subr.mxu0 0.0
    %897 = vmatpush1.xpose.msra.mxu0 0.0
    %898 = vmatprep.subr.mxu0 0.0
    %899 = vmatpush1.xpose.msra.mxu0 0.0
    %900 = vmatprep.subr.mxu0 0.0
    %901 = vmatpush1.xpose.msra.mxu0 0.0
    %902 = vmatprep.subr.mxu0 0.0
    %903 = vmatpush1.xpose.msra.mxu0 0.0
    %904 = vmatprep.subr.mxu0 0.0
    %905 = vmatpush1.xpose.msra.mxu0 0.0
    %906 = vmatprep.subr.mxu0 0.0
    %907 = vmatpush1.xpose.msra.mxu0 0.0
    %908 = vmatprep.subr.mxu0 0.0
    %909 = vmatpush1.xpose.msra.mxu0 0.0
    %910 = vmatprep.mubr.f32.mxu0 0.0
    %911 = vmatmul.mubr.f32.gmra.mrb[0].mxu0 %v842
    %v912 = vpop.f32.mrb[0].mxu0
    %v913 = vadd.f32 0.0, %v912
    %v914 = vpop.f32.mrb[0].mxu0
    %915 = vdwg.mxu0
    %916 = vrot.lane.b32.xlu0 %v194, 104
    %v917 = vpop.permute.xlu0 %916
    %918 = vrot.lane.b32.xlu0 %v278, 104
    %v919 = vpop.permute.xlu0 %918
    %v920 = vsel %vm367, %v917, 0
    %v922 = vsel %vm367, %v919, 0
    %924 = vmatprep.subr.mxu0 0.0
    %925 = vmatpush1.xpose.msra.mxu0 %v922
    %926 = vmatprep.subr.mxu0 0.0
    %927 = vmatpush1.xpose.msra.mxu0 0.0
    %928 = vmatprep.subr.mxu0 0.0
    %929 = vmatpush1.xpose.msra.mxu0 0.0
    %930 = vmatprep.subr.mxu0 0.0
    %931 = vmatpush1.xpose.msra.mxu0 0.0
    %932 = vmatprep.subr.mxu0 0.0
    %933 = vmatpush1.xpose.msra.mxu0 0.0
    %934 = vmatprep.subr.mxu0 0.0
    %935 = vmatpush1.xpose.msra.mxu0 0.0
    %936 = vmatprep.subr.mxu0 0.0
    %937 = vmatpush1.xpose.msra.mxu0 0.0
    %938 = vmatprep.subr.mxu0 0.0
    %939 = vmatpush1.xpose.msra.mxu0 0.0
    %940 = vmatprep.subr.mxu0 0.0
    %941 = vmatpush1.xpose.msra.mxu0 0.0
    %942 = vmatprep.subr.mxu0 0.0
    %943 = vmatpush1.xpose.msra.mxu0 0.0
    %944 = vmatprep.subr.mxu0 0.0
    %945 = vmatpush1.xpose.msra.mxu0 0.0
    %946 = vmatprep.subr.mxu0 0.0
    %947 = vmatpush1.xpose.msra.mxu0 0.0
    %948 = vmatprep.subr.mxu0 0.0
    %949 = vmatpush1.xpose.msra.mxu0 0.0
    %950 = vmatprep.subr.mxu0 0.0
    %951 = vmatpush1.xpose.msra.mxu0 0.0
    %952 = vmatprep.subr.mxu0 0.0
    %953 = vmatpush1.xpose.msra.mxu0 0.0
    %954 = vmatprep.subr.mxu0 0.0
    %955 = vmatpush1.xpose.msra.mxu0 0.0
    %956 = vmatprep.subr.mxu0 0.0
    %957 = vmatpush1.xpose.msra.mxu0 0.0
    %958 = vmatprep.subr.mxu0 0.0
    %959 = vmatpush1.xpose.msra.mxu0 0.0
    %960 = vmatprep.subr.mxu0 0.0
    %961 = vmatpush1.xpose.msra.mxu0 0.0
    %962 = vmatprep.subr.mxu0 0.0
    %963 = vmatpush1.xpose.msra.mxu0 0.0
    %964 = vmatprep.subr.mxu0 0.0
    %965 = vmatpush1.xpose.msra.mxu0 0.0
    %966 = vmatprep.subr.mxu0 0.0
    %967 = vmatpush1.xpose.msra.mxu0 0.0
    %968 = vmatprep.subr.mxu0 0.0
    %969 = vmatpush1.xpose.msra.mxu0 0.0
    %970 = vmatprep.subr.mxu0 0.0
    %971 = vmatpush1.xpose.msra.mxu0 0.0
    %972 = vmatprep.subr.mxu0 0.0
    %973 = vmatpush1.xpose.msra.mxu0 0.0
    %974 = vmatprep.subr.mxu0 0.0
    %975 = vmatpush1.xpose.msra.mxu0 0.0
    %976 = vmatprep.subr.mxu0 0.0
    %977 = vmatpush1.xpose.msra.mxu0 0.0
    %978 = vmatprep.subr.mxu0 0.0
    %979 = vmatpush1.xpose.msra.mxu0 0.0
    %980 = vmatprep.subr.mxu0 0.0
    %981 = vmatpush1.xpose.msra.mxu0 0.0
    %982 = vmatprep.subr.mxu0 0.0
    %983 = vmatpush1.xpose.msra.mxu0 0.0
    %984 = vmatprep.subr.mxu0 0.0
    %985 = vmatpush1.xpose.msra.mxu0 0.0
    %986 = vmatprep.subr.mxu0 0.0
    %987 = vmatpush1.xpose.msra.mxu0 0.0
    %988 = vmatprep.mubr.f32.mxu0 0.0
    %989 = vmatmul.mubr.f32.gmra.mrb[0].mxu0 %v920
    %v990 = vpop.f32.mrb[0].mxu0
    %v991 = vadd.f32 0.0, %v990
    %v992 = vpop.f32.mrb[0].mxu0
    %993 = vdwg.mxu0
    %994 = vst.msk [vmem:[#allocation2 + $0x30] sm:$0xff] %vm367, %v913
    %995 = vst.msk [vmem:[#allocation2 + $0x38] sm:$0xff] %vm367, %v991
    %v996 = vld [vmem:[#allocation2] sm:$0xff]
    %v997 = vld [vmem:[#allocation2 + $0x8] sm:$0xff]
    %v998 = vld [vmem:[#allocation2 + $0x10] sm:$0xff]
    %v999 = vld [vmem:[#allocation2 + $0x18] sm:$0xff]
    %v1000 = vld [vmem:[#allocation2 + $0x20] sm:$0xff]
    %v1001 = vld [vmem:[#allocation2 + $0x28] sm:$0xff]
    %v1002 = vld [vmem:[#allocation2 + $0x30] sm:$0xff]
    %v1003 = vld [vmem:[#allocation2 + $0x38] sm:$0xff]
    %v1004 = vsel %vm367, %v996, -inf
    %1005 = vmax.xlane.f32.xlu0 %v1004
    %v1006 = vpop.xlane.xlu0 %1005
    %v1007 = vsel %vm367, %v997, -inf
    %1008 = vmax.xlane.f32.xlu0 %v1007
    %v1009 = vpop.xlane.xlu0 %1008
    %v1010 = vsel %vm367, %v998, -inf
    %1011 = vmax.xlane.f32.xlu0 %v1010
    %v1012 = vpop.xlane.xlu0 %1011
    %v1013 = vsel %vm367, %v999, -inf
    %1014 = vmax.xlane.f32.xlu0 %v1013
    %v1015 = vpop.xlane.xlu0 %1014
    %v1016 = vsel %vm367, %v1000, -inf
    %1017 = vmax.xlane.f32.xlu0 %v1016
    %v1018 = vpop.xlane.xlu0 %1017
    %v1019 = vsel %vm367, %v1001, -inf
    %1020 = vmax.xlane.f32.xlu0 %v1019
    %v1021 = vpop.xlane.xlu0 %1020
    %v1022 = vsel %vm367, %v1002, -inf
    %1023 = vmax.xlane.f32.xlu0 %v1022
    %v1024 = vpop.xlane.xlu0 %1023
    %v1025 = vsel %vm367, %v1003, -inf
    %1026 = vmax.xlane.f32.xlu0 %v1025
    %v1027 = vpop.xlane.xlu0 %1026
    %v1028 = vsub.f32 %v996, %v1006
    %v1029 = vsub.f32 %v997, %v1009
    %v1030 = vsub.f32 %v998, %v1012
    %v1031 = vsub.f32 %v999, %v1015
    %v1032 = vsub.f32 %v1000, %v1018
    %v1033 = vsub.f32 %v1001, %v1021
    %v1034 = vsub.f32 %v1002, %v1024
    %v1035 = vsub.f32 %v1003, %v1027
    %v1036 = vmul.f32 %v1028, 1.442695
    %v1037 = vpow.pop %v1036
    %v1038 = vmul.f32 %v1029, 1.442695
    %v1039 = vpow.pop %v1038
    %v1040 = vmul.f32 %v1030, 1.442695
    %v1041 = vpow.pop %v1040
    %v1042 = vmul.f32 %v1031, 1.442695
    %v1043 = vpow.pop %v1042
    %v1044 = vmul.f32 %v1032, 1.442695
    %v1045 = vpow.pop %v1044
    %v1046 = vmul.f32 %v1033, 1.442695
    %v1047 = vpow.pop %v1046
    %v1048 = vmul.f32 %v1034, 1.442695
    %v1049 = vpow.pop %v1048
    %v1050 = vmul.f32 %v1035, 1.442695
    %v1051 = vpow.pop %v1050
    %v1052 = vsel %vm367, %v1037, 0.0
    %1053 = vadd.xlane.f32.xlu0 %v1052
    %v1054 = vpop.xlane.xlu0 %1053
    %v1055 = vsel %vm367, %v1039, 0.0
    %1056 = vadd.xlane.f32.xlu0 %v1055
    %v1057 = vpop.xlane.xlu0 %1056
    %v1058 = vsel %vm367, %v1041, 0.0
    %1059 = vadd.xlane.f32.xlu0 %v1058
    %v1060 = vpop.xlane.xlu0 %1059
    %v1061 = vsel %vm367, %v1043, 0.0
    %1062 = vadd.xlane.f32.xlu0 %v1061
    %v1063 = vpop.xlane.xlu0 %1062
    %v1064 = vsel %vm367, %v1045, 0.0
    %1065 = vadd.xlane.f32.xlu0 %v1064
    %v1066 = vpop.xlane.xlu0 %1065
    %v1067 = vsel %vm367, %v1047, 0.0
    %1068 = vadd.xlane.f32.xlu0 %v1067
    %v1069 = vpop.xlane.xlu0 %1068
    %v1070 = vsel %vm367, %v1049, 0.0
    %1071 = vadd.xlane.f32.xlu0 %v1070
    %v1072 = vpop.xlane.xlu0 %1071
    %v1073 = vsel %vm367, %v1051, 0.0
    %1074 = vadd.xlane.f32.xlu0 %v1073
    %v1075 = vpop.xlane.xlu0 %1074
    %v1076 = vrcp.pop %v1054
    %v1077 = vrcp.pop %v1057
    %v1078 = vrcp.pop %v1060
    %v1079 = vrcp.pop %v1063
    %v1080 = vrcp.pop %v1066
    %v1081 = vrcp.pop %v1069
    %v1082 = vrcp.pop %v1072
    %v1083 = vrcp.pop %v1075
    %v1084 = vmul.f32 %v1037, %v1076
    %v1085 = vmul.f32 %v1039, %v1077
    %v1086 = vmul.f32 %v1041, %v1078
    %v1087 = vmul.f32 %v1043, %v1079
    %v1088 = vmul.f32 %v1045, %v1080
    %v1089 = vmul.f32 %v1047, %v1081
    %v1090 = vmul.f32 %v1049, %v1082
    %v1091 = vmul.f32 %v1051, %v1083
    %v1093 = vsel %vm367, %v1084, 0
    %1095 = vmatprep.subr.mxu0 0.0
    %1096 = vmatpush1.msra.mxu0 %v359
    %1097 = vmatprep.subr.mxu0 0.0
    %1098 = vmatpush1.msra.mxu0 0.0
    %1099 = vmatprep.subr.mxu0 0.0
    %1100 = vmatpush1.msra.mxu0 0.0
    %1101 = vmatprep.subr.mxu0 0.0
    %1102 = vmatpush1.msra.mxu0 0.0
    %1103 = vmatprep.subr.mxu0 0.0
    %1104 = vmatpush1.msra.mxu0 0.0
    %1105 = vmatprep.subr.mxu0 0.0
    %1106 = vmatpush1.msra.mxu0 0.0
    %1107 = vmatprep.subr.mxu0 0.0
    %1108 = vmatpush1.msra.mxu0 0.0
    %1109 = vmatprep.subr.mxu0 0.0
    %1110 = vmatpush1.msra.mxu0 0.0
    %1111 = vmatprep.subr.mxu0 0.0
    %1112 = vmatpush1.msra.mxu0 0.0
    %1113 = vmatprep.subr.mxu0 0.0
    %1114 = vmatpush1.msra.mxu0 0.0
    %1115 = vmatprep.subr.mxu0 0.0
    %1116 = vmatpush1.msra.mxu0 0.0
    %1117 = vmatprep.subr.mxu0 0.0
    %1118 = vmatpush1.msra.mxu0 0.0
    %1119 = vmatprep.subr.mxu0 0.0
    %1120 = vmatpush1.msra.mxu0 0.0
    %1121 = vmatprep.subr.mxu0 0.0
    %1122 = vmatpush1.msra.mxu0 0.0
    %1123 = vmatprep.subr.mxu0 0.0
    %1124 = vmatpush1.msra.mxu0 0.0
    %1125 = vmatprep.subr.mxu0 0.0
    %1126 = vmatpush1.msra.mxu0 0.0
    %1127 = vmatprep.subr.mxu0 0.0
    %1128 = vmatpush1.msra.mxu0 0.0
    %1129 = vmatprep.subr.mxu0 0.0
    %1130 = vmatpush1.msra.mxu0 0.0
    %1131 = vmatprep.subr.mxu0 0.0
    %1132 = vmatpush1.msra.mxu0 0.0
    %1133 = vmatprep.subr.mxu0 0.0
    %1134 = vmatpush1.msra.mxu0 0.0
    %1135 = vmatprep.subr.mxu0 0.0
    %1136 = vmatpush1.msra.mxu0 0.0
    %1137 = vmatprep.subr.mxu0 0.0
    %1138 = vmatpush1.msra.mxu0 0.0
    %1139 = vmatprep.subr.mxu0 0.0
    %1140 = vmatpush1.msra.mxu0 0.0
    %1141 = vmatprep.subr.mxu0 0.0
    %1142 = vmatpush1.msra.mxu0 0.0
    %1143 = vmatprep.subr.mxu0 0.0
    %1144 = vmatpush1.msra.mxu0 0.0
    %1145 = vmatprep.subr.mxu0 0.0
    %1146 = vmatpush1.msra.mxu0 0.0
    %1147 = vmatprep.subr.mxu0 0.0
    %1148 = vmatpush1.msra.mxu0 0.0
    %1149 = vmatprep.subr.mxu0 0.0
    %1150 = vmatpush1.msra.mxu0 0.0
    %1151 = vmatprep.subr.mxu0 0.0
    %1152 = vmatpush1.msra.mxu0 0.0
    %1153 = vmatprep.subr.mxu0 0.0
    %1154 = vmatpush1.msra.mxu0 0.0
    %1155 = vmatprep.subr.mxu0 0.0
    %1156 = vmatpush1.msra.mxu0 0.0
    %1157 = vmatprep.subr.mxu0 0.0
    %1158 = vmatpush1.msra.mxu0 0.0
    %1159 = vmatprep.mubr.f32.mxu0 0.0
    %1160 = vmatmul.mubr.f32.gmra.mrb[0].mxu0 %v1093
    %v1161 = vpop.f32.mrb[0].mxu0
    %v1162 = vadd.f32 0.0, %v1161
    %v1163 = vpop.f32.mrb[0].mxu0
    %1164 = vdwg.mxu0
    %v1166 = vsel %vm367, %v1085, 0
    %1168 = vmatprep.subr.mxu0 0.0
    %1169 = vmatpush1.msra.mxu0 %v364
    %1170 = vmatprep.subr.mxu0 0.0
    %1171 = vmatpush1.msra.mxu0 0.0
    %1172 = vmatprep.subr.mxu0 0.0
    %1173 = vmatpush1.msra.mxu0 0.0
    %1174 = vmatprep.subr.mxu0 0.0
    %1175 = vmatpush1.msra.mxu0 0.0
    %1176 = vmatprep.subr.mxu0 0.0
    %1177 = vmatpush1.msra.mxu0 0.0
    %1178 = vmatprep.subr.mxu0 0.0
    %1179 = vmatpush1.msra.mxu0 0.0
    %1180 = vmatprep.subr.mxu0 0.0
    %1181 = vmatpush1.msra.mxu0 0.0
    %1182 = vmatprep.subr.mxu0 0.0
    %1183 = vmatpush1.msra.mxu0 0.0
    %1184 = vmatprep.subr.mxu0 0.0
    %1185 = vmatpush1.msra.mxu0 0.0
    %1186 = vmatprep.subr.mxu0 0.0
    %1187 = vmatpush1.msra.mxu0 0.0
    %1188 = vmatprep.subr.mxu0 0.0
    %1189 = vmatpush1.msra.mxu0 0.0
    %1190 = vmatprep.subr.mxu0 0.0
    %1191 = vmatpush1.msra.mxu0 0.0
    %1192 = vmatprep.subr.mxu0 0.0
    %1193 = vmatpush1.msra.mxu0 0.0
    %1194 = vmatprep.subr.mxu0 0.0
    %1195 = vmatpush1.msra.mxu0 0.0
    %1196 = vmatprep.subr.mxu0 0.0
    %1197 = vmatpush1.msra.mxu0 0.0
    %1198 = vmatprep.subr.mxu0 0.0
    %1199 = vmatpush1.msra.mxu0 0.0
    %1200 = vmatprep.subr.mxu0 0.0
    %1201 = vmatpush1.msra.mxu0 0.0
    %1202 = vmatprep.subr.mxu0 0.0
    %1203 = vmatpush1.msra.mxu0 0.0
    %1204 = vmatprep.subr.mxu0 0.0
    %1205 = vmatpush1.msra.mxu0 0.0
    %1206 = vmatprep.subr.mxu0 0.0
    %1207 = vmatpush1.msra.mxu0 0.0
    %1208 = vmatprep.subr.mxu0 0.0
    %1209 = vmatpush1.msra.mxu0 0.0
    %1210 = vmatprep.subr.mxu0 0.0
    %1211 = vmatpush1.msra.mxu0 0.0
    %1212 = vmatprep.subr.mxu0 0.0
    %1213 = vmatpush1.msra.mxu0 0.0
    %1214 = vmatprep.subr.mxu0 0.0
    %1215 = vmatpush1.msra.mxu0 0.0
    %1216 = vmatprep.subr.mxu0 0.0
    %1217 = vmatpush1.msra.mxu0 0.0
    %1218 = vmatprep.subr.mxu0 0.0
    %1219 = vmatpush1.msra.mxu0 0.0
    %1220 = vmatprep.subr.mxu0 0.0
    %1221 = vmatpush1.msra.mxu0 0.0
    %1222 = vmatprep.subr.mxu0 0.0
    %1223 = vmatpush1.msra.mxu0 0.0
    %1224 = vmatprep.subr.mxu0 0.0
    %1225 = vmatpush1.msra.mxu0 0.0
    %1226 = vmatprep.subr.mxu0 0.0
    %1227 = vmatpush1.msra.mxu0 0.0
    %1228 = vmatprep.subr.mxu0 0.0
    %1229 = vmatpush1.msra.mxu0 0.0
    %1230 = vmatprep.subr.mxu0 0.0
    %1231 = vmatpush1.msra.mxu0 0.0
    %1232 = vmatprep.mubr.f32.mxu0 0.0
    %1233 = vmatmul.mubr.f32.gmra.mrb[0].mxu0 %v1166
    %v1234 = vpop.f32.mrb[0].mxu0
    %v1235 = vadd.f32 0.0, %v1234
    %v1236 = vpop.f32.mrb[0].mxu0
    %1237 = vdwg.mxu0
    %1238 = vst.msk [vmem:[#allocation3] sm:$0xff] %vm367, %v1162
    %1239 = vst.msk [vmem:[#allocation3 + $0x8] sm:$0xff] %vm367, %v1235
    %1241 = vrot.lane.b32.xlu0 %v359, 120
    %v1242 = vpop.permute.xlu0 %1241
    %v1245 = vsel %vm367, %v1086, 0
    %1247 = vmatprep.subr.mxu0 0.0
    %1248 = vmatpush1.msra.mxu0 %v1242
    %1249 = vmatprep.subr.mxu0 0.0
    %1250 = vmatpush1.msra.mxu0 0.0
    %1251 = vmatprep.subr.mxu0 0.0
    %1252 = vmatpush1.msra.mxu0 0.0
    %1253 = vmatprep.subr.mxu0 0.0
    %1254 = vmatpush1.msra.mxu0 0.0
    %1255 = vmatprep.subr.mxu0 0.0
    %1256 = vmatpush1.msra.mxu0 0.0
    %1257 = vmatprep.subr.mxu0 0.0
    %1258 = vmatpush1.msra.mxu0 0.0
    %1259 = vmatprep.subr.mxu0 0.0
    %1260 = vmatpush1.msra.mxu0 0.0
    %1261 = vmatprep.subr.mxu0 0.0
    %1262 = vmatpush1.msra.mxu0 0.0
    %1263 = vmatprep.subr.mxu0 0.0
    %1264 = vmatpush1.msra.mxu0 0.0
    %1265 = vmatprep.subr.mxu0 0.0
    %1266 = vmatpush1.msra.mxu0 0.0
    %1267 = vmatprep.subr.mxu0 0.0
    %1268 = vmatpush1.msra.mxu0 0.0
    %1269 = vmatprep.subr.mxu0 0.0
    %1270 = vmatpush1.msra.mxu0 0.0
    %1271 = vmatprep.subr.mxu0 0.0
    %1272 = vmatpush1.msra.mxu0 0.0
    %1273 = vmatprep.subr.mxu0 0.0
    %1274 = vmatpush1.msra.mxu0 0.0
    %1275 = vmatprep.subr.mxu0 0.0
    %1276 = vmatpush1.msra.mxu0 0.0
    %1277 = vmatprep.subr.mxu0 0.0
    %1278 = vmatpush1.msra.mxu0 0.0
    %1279 = vmatprep.subr.mxu0 0.0
    %1280 = vmatpush1.msra.mxu0 0.0
    %1281 = vmatprep.subr.mxu0 0.0
    %1282 = vmatpush1.msra.mxu0 0.0
    %1283 = vmatprep.subr.mxu0 0.0
    %1284 = vmatpush1.msra.mxu0 0.0
    %1285 = vmatprep.subr.mxu0 0.0
    %1286 = vmatpush1.msra.mxu0 0.0
    %1287 = vmatprep.subr.mxu0 0.0
    %1288 = vmatpush1.msra.mxu0 0.0
    %1289 = vmatprep.subr.mxu0 0.0
    %1290 = vmatpush1.msra.mxu0 0.0
    %1291 = vmatprep.subr.mxu0 0.0
    %1292 = vmatpush1.msra.mxu0 0.0
    %1293 = vmatprep.subr.mxu0 0.0
    %1294 = vmatpush1.msra.mxu0 0.0
    %1295 = vmatprep.subr.mxu0 0.0
    %1296 = vmatpush1.msra.mxu0 0.0
    %1297 = vmatprep.subr.mxu0 0.0
    %1298 = vmatpush1.msra.mxu0 0.0
    %1299 = vmatprep.subr.mxu0 0.0
    %1300 = vmatpush1.msra.mxu0 0.0
    %1301 = vmatprep.subr.mxu0 0.0
    %1302 = vmatpush1.msra.mxu0 0.0
    %1303 = vmatprep.subr.mxu0 0.0
    %1304 = vmatpush1.msra.mxu0 0.0
    %1305 = vmatprep.subr.mxu0 0.0
    %1306 = vmatpush1.msra.mxu0 0.0
    %1307 = vmatprep.subr.mxu0 0.0
    %1308 = vmatpush1.msra.mxu0 0.0
    %1309 = vmatprep.subr.mxu0 0.0
    %1310 = vmatpush1.msra.mxu0 0.0
    %1311 = vmatprep.mubr.f32.mxu0 0.0
    %1312 = vmatmul.mubr.f32.gmra.mrb[0].mxu0 %v1245
    %v1313 = vpop.f32.mrb[0].mxu0
    %v1314 = vadd.f32 0.0, %v1313
    %v1315 = vpop.f32.mrb[0].mxu0
    %1316 = vdwg.mxu0
    %1318 = vrot.lane.b32.xlu0 %v364, 120
    %v1319 = vpop.permute.xlu0 %1318
    %v1322 = vsel %vm367, %v1087, 0
    %1324 = vmatprep.subr.mxu0 0.0
    %1325 = vmatpush1.msra.mxu0 %v1319
    %1326 = vmatprep.subr.mxu0 0.0
    %1327 = vmatpush1.msra.mxu0 0.0
    %1328 = vmatprep.subr.mxu0 0.0
    %1329 = vmatpush1.msra.mxu0 0.0
    %1330 = vmatprep.subr.mxu0 0.0
    %1331 = vmatpush1.msra.mxu0 0.0
    %1332 = vmatprep.subr.mxu0 0.0
    %1333 = vmatpush1.msra.mxu0 0.0
    %1334 = vmatprep.subr.mxu0 0.0
    %1335 = vmatpush1.msra.mxu0 0.0
    %1336 = vmatprep.subr.mxu0 0.0
    %1337 = vmatpush1.msra.mxu0 0.0
    %1338 = vmatprep.subr.mxu0 0.0
    %1339 = vmatpush1.msra.mxu0 0.0
    %1340 = vmatprep.subr.mxu0 0.0
    %1341 = vmatpush1.msra.mxu0 0.0
    %1342 = vmatprep.subr.mxu0 0.0
    %1343 = vmatpush1.msra.mxu0 0.0
    %1344 = vmatprep.subr.mxu0 0.0
    %1345 = vmatpush1.msra.mxu0 0.0
    %1346 = vmatprep.subr.mxu0 0.0
    %1347 = vmatpush1.msra.mxu0 0.0
    %1348 = vmatprep.subr.mxu0 0.0
    %1349 = vmatpush1.msra.mxu0 0.0
    %1350 = vmatprep.subr.mxu0 0.0
    %1351 = vmatpush1.msra.mxu0 0.0
    %1352 = vmatprep.subr.mxu0 0.0
    %1353 = vmatpush1.msra.mxu0 0.0
    %1354 = vmatprep.subr.mxu0 0.0
    %1355 = vmatpush1.msra.mxu0 0.0
    %1356 = vmatprep.subr.mxu0 0.0
    %1357 = vmatpush1.msra.mxu0 0.0
    %1358 = vmatprep.subr.mxu0 0.0
    %1359 = vmatpush1.msra.mxu0 0.0
    %1360 = vmatprep.subr.mxu0 0.0
    %1361 = vmatpush1.msra.mxu0 0.0
    %1362 = vmatprep.subr.mxu0 0.0
    %1363 = vmatpush1.msra.mxu0 0.0
    %1364 = vmatprep.subr.mxu0 0.0
    %1365 = vmatpush1.msra.mxu0 0.0
    %1366 = vmatprep.subr.mxu0 0.0
    %1367 = vmatpush1.msra.mxu0 0.0
    %1368 = vmatprep.subr.mxu0 0.0
    %1369 = vmatpush1.msra.mxu0 0.0
    %1370 = vmatprep.subr.mxu0 0.0
    %1371 = vmatpush1.msra.mxu0 0.0
    %1372 = vmatprep.subr.mxu0 0.0
    %1373 = vmatpush1.msra.mxu0 0.0
    %1374 = vmatprep.subr.mxu0 0.0
    %1375 = vmatpush1.msra.mxu0 0.0
    %1376 = vmatprep.subr.mxu0 0.0
    %1377 = vmatpush1.msra.mxu0 0.0
    %1378 = vmatprep.subr.mxu0 0.0
    %1379 = vmatpush1.msra.mxu0 0.0
    %1380 = vmatprep.subr.mxu0 0.0
    %1381 = vmatpush1.msra.mxu0 0.0
    %1382 = vmatprep.subr.mxu0 0.0
    %1383 = vmatpush1.msra.mxu0 0.0
    %1384 = vmatprep.subr.mxu0 0.0
    %1385 = vmatpush1.msra.mxu0 0.0
    %1386 = vmatprep.subr.mxu0 0.0
    %1387 = vmatpush1.msra.mxu0 0.0
    %1388 = vmatprep.mubr.f32.mxu0 0.0
    %1389 = vmatmul.mubr.f32.gmra.mrb[0].mxu0 %v1322
    %v1390 = vpop.f32.mrb[0].mxu0
    %v1391 = vadd.f32 0.0, %v1390
    %v1392 = vpop.f32.mrb[0].mxu0
    %1393 = vdwg.mxu0
    %1396 = vrot.lane.b32.xlu0 %v1314, 8
    %v1397 = vpop.permute.xlu0 %1396
    %1398 = vrot.lane.b32.xlu0 %v1391, 8
    %v1399 = vpop.permute.xlu0 %1398
    %vm1402 = vcmask 130112
    %1403 = vst.msk [vmem:[#allocation3] sm:$0xff] %vm1402, %v1397
    %1404 = vst.msk [vmem:[#allocation3 + $0x8] sm:$0xff] %vm1402, %v1399
    %1405 = vrot.lane.b32.xlu0 %v359, 112
    %v1406 = vpop.permute.xlu0 %1405
    %v1409 = vsel %vm367, %v1088, 0
    %1411 = vmatprep.subr.mxu0 0.0
    %1412 = vmatpush1.msra.mxu0 %v1406
    %1413 = vmatprep.subr.mxu0 0.0
    %1414 = vmatpush1.msra.mxu0 0.0
    %1415 = vmatprep.subr.mxu0 0.0
    %1416 = vmatpush1.msra.mxu0 0.0
    %1417 = vmatprep.subr.mxu0 0.0
    %1418 = vmatpush1.msra.mxu0 0.0
    %1419 = vmatprep.subr.mxu0 0.0
    %1420 = vmatpush1.msra.mxu0 0.0
    %1421 = vmatprep.subr.mxu0 0.0
    %1422 = vmatpush1.msra.mxu0 0.0
    %1423 = vmatprep.subr.mxu0 0.0
    %1424 = vmatpush1.msra.mxu0 0.0
    %1425 = vmatprep.subr.mxu0 0.0
    %1426 = vmatpush1.msra.mxu0 0.0
    %1427 = vmatprep.subr.mxu0 0.0
    %1428 = vmatpush1.msra.mxu0 0.0
    %1429 = vmatprep.subr.mxu0 0.0
    %1430 = vmatpush1.msra.mxu0 0.0
    %1431 = vmatprep.subr.mxu0 0.0
    %1432 = vmatpush1.msra.mxu0 0.0
    %1433 = vmatprep.subr.mxu0 0.0
    %1434 = vmatpush1.msra.mxu0 0.0
    %1435 = vmatprep.subr.mxu0 0.0
    %1436 = vmatpush1.msra.mxu0 0.0
    %1437 = vmatprep.subr.mxu0 0.0
    %1438 = vmatpush1.msra.mxu0 0.0
    %1439 = vmatprep.subr.mxu0 0.0
    %1440 = vmatpush1.msra.mxu0 0.0
    %1441 = vmatprep.subr.mxu0 0.0
    %1442 = vmatpush1.msra.mxu0 0.0
    %1443 = vmatprep.subr.mxu0 0.0
    %1444 = vmatpush1.msra.mxu0 0.0
    %1445 = vmatprep.subr.mxu0 0.0
    %1446 = vmatpush1.msra.mxu0 0.0
    %1447 = vmatprep.subr.mxu0 0.0
    %1448 = vmatpush1.msra.mxu0 0.0
    %1449 = vmatprep.subr.mxu0 0.0
    %1450 = vmatpush1.msra.mxu0 0.0
    %1451 = vmatprep.subr.mxu0 0.0
    %1452 = vmatpush1.msra.mxu0 0.0
    %1453 = vmatprep.subr.mxu0 0.0
    %1454 = vmatpush1.msra.mxu0 0.0
    %1455 = vmatprep.subr.mxu0 0.0
    %1456 = vmatpush1.msra.mxu0 0.0
    %1457 = vmatprep.subr.mxu0 0.0
    %1458 = vmatpush1.msra.mxu0 0.0
    %1459 = vmatprep.subr.mxu0 0.0
    %1460 = vmatpush1.msra.mxu0 0.0
    %1461 = vmatprep.subr.mxu0 0.0
    %1462 = vmatpush1.msra.mxu0 0.0
    %1463 = vmatprep.subr.mxu0 0.0
    %1464 = vmatpush1.msra.mxu0 0.0
    %1465 = vmatprep.subr.mxu0 0.0
    %1466 = vmatpush1.msra.mxu0 0.0
    %1467 = vmatprep.subr.mxu0 0.0
    %1468 = vmatpush1.msra.mxu0 0.0
    %1469 = vmatprep.subr.mxu0 0.0
    %1470 = vmatpush1.msra.mxu0 0.0
    %1471 = vmatprep.subr.mxu0 0.0
    %1472 = vmatpush1.msra.mxu0 0.0
    %1473 = vmatprep.subr.mxu0 0.0
    %1474 = vmatpush1.msra.mxu0 0.0
    %1475 = vmatprep.mubr.f32.mxu0 0.0
    %1476 = vmatmul.mubr.f32.gmra.mrb[0].mxu0 %v1409
    %v1477 = vpop.f32.mrb[0].mxu0
    %v1478 = vadd.f32 0.0, %v1477
    %v1479 = vpop.f32.mrb[0].mxu0
    %1480 = vdwg.mxu0
    %1481 = vrot.lane.b32.xlu0 %v364, 112
    %v1482 = vpop.permute.xlu0 %1481
    %v1485 = vsel %vm367, %v1089, 0
    %1487 = vmatprep.subr.mxu0 0.0
    %1488 = vmatpush1.msra.mxu0 %v1482
    %1489 = vmatprep.subr.mxu0 0.0
    %1490 = vmatpush1.msra.mxu0 0.0
    %1491 = vmatprep.subr.mxu0 0.0
    %1492 = vmatpush1.msra.mxu0 0.0
    %1493 = vmatprep.subr.mxu0 0.0
    %1494 = vmatpush1.msra.mxu0 0.0
    %1495 = vmatprep.subr.mxu0 0.0
    %1496 = vmatpush1.msra.mxu0 0.0
    %1497 = vmatprep.subr.mxu0 0.0
    %1498 = vmatpush1.msra.mxu0 0.0
    %1499 = vmatprep.subr.mxu0 0.0
    %1500 = vmatpush1.msra.mxu0 0.0
    %1501 = vmatprep.subr.mxu0 0.0
    %1502 = vmatpush1.msra.mxu0 0.0
    %1503 = vmatprep.subr.mxu0 0.0
    %1504 = vmatpush1.msra.mxu0 0.0
    %1505 = vmatprep.subr.mxu0 0.0
    %1506 = vmatpush1.msra.mxu0 0.0
    %1507 = vmatprep.subr.mxu0 0.0
    %1508 = vmatpush1.msra.mxu0 0.0
    %1509 = vmatprep.subr.mxu0 0.0
    %1510 = vmatpush1.msra.mxu0 0.0
    %1511 = vmatprep.subr.mxu0 0.0
    %1512 = vmatpush1.msra.mxu0 0.0
    %1513 = vmatprep.subr.mxu0 0.0
    %1514 = vmatpush1.msra.mxu0 0.0
    %1515 = vmatprep.subr.mxu0 0.0
    %1516 = vmatpush1.msra.mxu0 0.0
    %1517 = vmatprep.subr.mxu0 0.0
    %1518 = vmatpush1.msra.mxu0 0.0
    %1519 = vmatprep.subr.mxu0 0.0
    %1520 = vmatpush1.msra.mxu0 0.0
    %1521 = vmatprep.subr.mxu0 0.0
    %1522 = vmatpush1.msra.mxu0 0.0
    %1523 = vmatprep.subr.mxu0 0.0
    %1524 = vmatpush1.msra.mxu0 0.0
    %1525 = vmatprep.subr.mxu0 0.0
    %1526 = vmatpush1.msra.mxu0 0.0
    %1527 = vmatprep.subr.mxu0 0.0
    %1528 = vmatpush1.msra.mxu0 0.0
    %1529 = vmatprep.subr.mxu0 0.0
    %1530 = vmatpush1.msra.mxu0 0.0
    %1531 = vmatprep.subr.mxu0 0.0
    %1532 = vmatpush1.msra.mxu0 0.0
    %1533 = vmatprep.subr.mxu0 0.0
    %1534 = vmatpush1.msra.mxu0 0.0
    %1535 = vmatprep.subr.mxu0 0.0
    %1536 = vmatpush1.msra.mxu0 0.0
    %1537 = vmatprep.subr.mxu0 0.0
    %1538 = vmatpush1.msra.mxu0 0.0
    %1539 = vmatprep.subr.mxu0 0.0
    %1540 = vmatpush1.msra.mxu0 0.0
    %1541 = vmatprep.subr.mxu0 0.0
    %1542 = vmatpush1.msra.mxu0 0.0
    %1543 = vmatprep.subr.mxu0 0.0
    %1544 = vmatpush1.msra.mxu0 0.0
    %1545 = vmatprep.subr.mxu0 0.0
    %1546 = vmatpush1.msra.mxu0 0.0
    %1547 = vmatprep.subr.mxu0 0.0
    %1548 = vmatpush1.msra.mxu0 0.0
    %1549 = vmatprep.subr.mxu0 0.0
    %1550 = vmatpush1.msra.mxu0 0.0
    %1551 = vmatprep.mubr.f32.mxu0 0.0
    %1552 = vmatmul.mubr.f32.gmra.mrb[0].mxu0 %v1485
    %v1553 = vpop.f32.mrb[0].mxu0
    %v1554 = vadd.f32 0.0, %v1553
    %v1555 = vpop.f32.mrb[0].mxu0
    %1556 = vdwg.mxu0
    %1559 = vrot.lane.b32.xlu0 %v1478, 16
    %v1560 = vpop.permute.xlu0 %1559
    %1561 = vrot.lane.b32.xlu0 %v1554, 16
    %v1562 = vpop.permute.xlu0 %1561
    %vm1565 = vcmask 195712
    %1566 = vst.msk [vmem:[#allocation3] sm:$0xff] %vm1565, %v1560
    %1567 = vst.msk [vmem:[#allocation3 + $0x8] sm:$0xff] %vm1565, %v1562
    %1568 = vrot.lane.b32.xlu0 %v359, 104
    %v1569 = vpop.permute.xlu0 %1568
    %v1572 = vsel %vm367, %v1090, 0
    %1574 = vmatprep.subr.mxu0 0.0
    %1575 = vmatpush1.msra.mxu0 %v1569
    %1576 = vmatprep.subr.mxu0 0.0
    %1577 = vmatpush1.msra.mxu0 0.0
    %1578 = vmatprep.subr.mxu0 0.0
    %1579 = vmatpush1.msra.mxu0 0.0
    %1580 = vmatprep.subr.mxu0 0.0
    %1581 = vmatpush1.msra.mxu0 0.0
    %1582 = vmatprep.subr.mxu0 0.0
    %1583 = vmatpush1.msra.mxu0 0.0
    %1584 = vmatprep.subr.mxu0 0.0
    %1585 = vmatpush1.msra.mxu0 0.0
    %1586 = vmatprep.subr.mxu0 0.0
    %1587 = vmatpush1.msra.mxu0 0.0
    %1588 = vmatprep.subr.mxu0 0.0
    %1589 = vmatpush1.msra.mxu0 0.0
    %1590 = vmatprep.subr.mxu0 0.0
    %1591 = vmatpush1.msra.mxu0 0.0
    %1592 = vmatprep.subr.mxu0 0.0
    %1593 = vmatpush1.msra.mxu0 0.0
    %1594 = vmatprep.subr.mxu0 0.0
    %1595 = vmatpush1.msra.mxu0 0.0
    %1596 = vmatprep.subr.mxu0 0.0
    %1597 = vmatpush1.msra.mxu0 0.0
    %1598 = vmatprep.subr.mxu0 0.0
    %1599 = vmatpush1.msra.mxu0 0.0
    %1600 = vmatprep.subr.mxu0 0.0
    %1601 = vmatpush1.msra.mxu0 0.0
    %1602 = vmatprep.subr.mxu0 0.0
    %1603 = vmatpush1.msra.mxu0 0.0
    %1604 = vmatprep.subr.mxu0 0.0
    %1605 = vmatpush1.msra.mxu0 0.0
    %1606 = vmatprep.subr.mxu0 0.0
    %1607 = vmatpush1.msra.mxu0 0.0
    %1608 = vmatprep.subr.mxu0 0.0
    %1609 = vmatpush1.msra.mxu0 0.0
    %1610 = vmatprep.subr.mxu0 0.0
    %1611 = vmatpush1.msra.mxu0 0.0
    %1612 = vmatprep.subr.mxu0 0.0
    %1613 = vmatpush1.msra.mxu0 0.0
    %1614 = vmatprep.subr.mxu0 0.0
    %1615 = vmatpush1.msra.mxu0 0.0
    %1616 = vmatprep.subr.mxu0 0.0
    %1617 = vmatpush1.msra.mxu0 0.0
    %1618 = vmatprep.subr.mxu0 0.0
    %1619 = vmatpush1.msra.mxu0 0.0
    %1620 = vmatprep.subr.mxu0 0.0
    %1621 = vmatpush1.msra.mxu0 0.0
    %1622 = vmatprep.subr.mxu0 0.0
    %1623 = vmatpush1.msra.mxu0 0.0
    %1624 = vmatprep.subr.mxu0 0.0
    %1625 = vmatpush1.msra.mxu0 0.0
    %1626 = vmatprep.subr.mxu0 0.0
    %1627 = vmatpush1.msra.mxu0 0.0
    %1628 = vmatprep.subr.mxu0 0.0
    %1629 = vmatpush1.msra.mxu0 0.0
    %1630 = vmatprep.subr.mxu0 0.0
    %1631 = vmatpush1.msra.mxu0 0.0
    %1632 = vmatprep.subr.mxu0 0.0
    %1633 = vmatpush1.msra.mxu0 0.0
    %1634 = vmatprep.subr.mxu0 0.0
    %1635 = vmatpush1.msra.mxu0 0.0
    %1636 = vmatprep.subr.mxu0 0.0
    %1637 = vmatpush1.msra.mxu0 0.0
    %1638 = vmatprep.mubr.f32.mxu0 0.0
    %1639 = vmatmul.mubr.f32.gmra.mrb[0].mxu0 %v1572
    %v1640 = vpop.f32.mrb[0].mxu0
    %v1641 = vadd.f32 0.0, %v1640
    %v1642 = vpop.f32.mrb[0].mxu0
    %1643 = vdwg.mxu0
    %1644 = vrot.lane.b32.xlu0 %v364, 104
    %v1645 = vpop.permute.xlu0 %1644
    %v1648 = vsel %vm367, %v1091, 0
    %1650 = vmatprep.subr.mxu0 0.0
    %1651 = vmatpush1.msra.mxu0 %v1645
    %1652 = vmatprep.subr.mxu0 0.0
    %1653 = vmatpush1.msra.mxu0 0.0
    %1654 = vmatprep.subr.mxu0 0.0
    %1655 = vmatpush1.msra.mxu0 0.0
    %1656 = vmatprep.subr.mxu0 0.0
    %1657 = vmatpush1.msra.mxu0 0.0
    %1658 = vmatprep.subr.mxu0 0.0
    %1659 = vmatpush1.msra.mxu0 0.0
    %1660 = vmatprep.subr.mxu0 0.0
    %1661 = vmatpush1.msra.mxu0 0.0
    %1662 = vmatprep.subr.mxu0 0.0
    %1663 = vmatpush1.msra.mxu0 0.0
    %1664 = vmatprep.subr.mxu0 0.0
    %1665 = vmatpush1.msra.mxu0 0.0
    %1666 = vmatprep.subr.mxu0 0.0
    %1667 = vmatpush1.msra.mxu0 0.0
    %1668 = vmatprep.subr.mxu0 0.0
    %1669 = vmatpush1.msra.mxu0 0.0
    %1670 = vmatprep.subr.mxu0 0.0
    %1671 = vmatpush1.msra.mxu0 0.0
    %1672 = vmatprep.subr.mxu0 0.0
    %1673 = vmatpush1.msra.mxu0 0.0
    %1674 = vmatprep.subr.mxu0 0.0
    %1675 = vmatpush1.msra.mxu0 0.0
    %1676 = vmatprep.subr.mxu0 0.0
    %1677 = vmatpush1.msra.mxu0 0.0
    %1678 = vmatprep.subr.mxu0 0.0
    %1679 = vmatpush1.msra.mxu0 0.0
    %1680 = vmatprep.subr.mxu0 0.0
    %1681 = vmatpush1.msra.mxu0 0.0
    %1682 = vmatprep.subr.mxu0 0.0
    %1683 = vmatpush1.msra.mxu0 0.0
    %1684 = vmatprep.subr.mxu0 0.0
    %1685 = vmatpush1.msra.mxu0 0.0
    %1686 = vmatprep.subr.mxu0 0.0
    %1687 = vmatpush1.msra.mxu0 0.0
    %1688 = vmatprep.subr.mxu0 0.0
    %1689 = vmatpush1.msra.mxu0 0.0
    %1690 = vmatprep.subr.mxu0 0.0
    %1691 = vmatpush1.msra.mxu0 0.0
    %1692 = vmatprep.subr.mxu0 0.0
    %1693 = vmatpush1.msra.mxu0 0.0
    %1694 = vmatprep.subr.mxu0 0.0
    %1695 = vmatpush1.msra.mxu0 0.0
    %1696 = vmatprep.subr.mxu0 0.0
    %1697 = vmatpush1.msra.mxu0 0.0
    %1698 = vmatprep.subr.mxu0 0.0
    %1699 = vmatpush1.msra.mxu0 0.0
    %1700 = vmatprep.subr.mxu0 0.0
    %1701 = vmatpush1.msra.mxu0 0.0
    %1702 = vmatprep.subr.mxu0 0.0
    %1703 = vmatpush1.msra.mxu0 0.0
    %1704 = vmatprep.subr.mxu0 0.0
    %1705 = vmatpush1.msra.mxu0 0.0
    %1706 = vmatprep.subr.mxu0 0.0
    %1707 = vmatpush1.msra.mxu0 0.0
    %1708 = vmatprep.subr.mxu0 0.0
    %1709 = vmatpush1.msra.mxu0 0.0
    %1710 = vmatprep.subr.mxu0 0.0
    %1711 = vmatpush1.msra.mxu0 0.0
    %1712 = vmatprep.subr.mxu0 0.0
    %1713 = vmatpush1.msra.mxu0 0.0
    %1714 = vmatprep.mubr.f32.mxu0 0.0
    %1715 = vmatmul.mubr.f32.gmra.mrb[0].mxu0 %v1648
    %v1716 = vpop.f32.mrb[0].mxu0
    %v1717 = vadd.f32 0.0, %v1716
    %v1718 = vpop.f32.mrb[0].mxu0
    %1719 = vdwg.mxu0
    %1722 = vrot.lane.b32.xlu0 %v1641, 24
    %v1723 = vpop.permute.xlu0 %1722
    %1724 = vrot.lane.b32.xlu0 %v1717, 24
    %v1725 = vpop.permute.xlu0 %1724
    %vm1728 = vcmask 261312
    %1729 = vst.msk [vmem:[#allocation3] sm:$0xff] %vm1728, %v1723
    %1730 = vst.msk [vmem:[#allocation3 + $0x8] sm:$0xff] %vm1728, %v1725
    %v1731 = vld [vmem:[#allocation3] sm:$0xff]
    %v1732 = vld [vmem:[#allocation3 + $0x8] sm:$0xff]
    %v1733 = vld [vmem:[#allocation7] sm:$0xff]
    %v1734 = vld [vmem:[#allocation7 + $0x8] sm:$0xff]
    %v1735 = vld [vmem:[#allocation7 + $0x10] sm:$0xff]
    %v1736 = vld [vmem:[#allocation7 + $0x18] sm:$0xff]
    %v1737 = vld [vmem:[%s8] sm:$0x1]
    %v1739 = vlaneseq
    %v1740 = vshrl.u32 %v1739, 7
    %v1741 = vsub.s32 0, %v1740
    %v1742 = vrot.slane %v1737, %v1741
    %v1745 = vsel %vm111, %v1731, 0
    %v1748 = vsel %vm111, %v1732, 0
    %1750 = vmatprep.subr.mxu0 0.0
    %1751 = vmatpush1.msra.mxu0 %v1733
    %1752 = vmatprep.subr.mxu0 0.0
    %1753 = vmatpush1.msra.mxu0 %v1734
    %1754 = vmatprep.subr.mxu0 0.0
    %1755 = vmatpush1.msra.mxu0 %v1735
    %1756 = vmatprep.subr.mxu0 0.0
    %1757 = vmatpush1.msra.mxu0 %v1736
    %1758 = vmatprep.subr.mxu0 0.0
    %1759 = vmatpush1.msra.mxu0 0.0
    %1760 = vmatprep.subr.mxu0 0.0
    %1761 = vmatpush1.msra.mxu0 0.0
    %1762 = vmatprep.subr.mxu0 0.0
    %1763 = vmatpush1.msra.mxu0 0.0
    %1764 = vmatprep.subr.mxu0 0.0
    %1765 = vmatpush1.msra.mxu0 0.0
    %1766 = vmatprep.subr.mxu0 0.0
    %1767 = vmatpush1.msra.mxu0 0.0
    %1768 = vmatprep.subr.mxu0 0.0
    %1769 = vmatpush1.msra.mxu0 0.0
    %1770 = vmatprep.subr.mxu0 0.0
    %1771 = vmatpush1.msra.mxu0 0.0
    %1772 = vmatprep.subr.mxu0 0.0
    %1773 = vmatpush1.msra.mxu0 0.0
    %1774 = vmatprep.subr.mxu0 0.0
    %1775 = vmatpush1.msra.mxu0 0.0
    %1776 = vmatprep.subr.mxu0 0.0
    %1777 = vmatpush1.msra.mxu0 0.0
    %1778 = vmatprep.subr.mxu0 0.0
    %1779 = vmatpush1.msra.mxu0 0.0
    %1780 = vmatprep.subr.mxu0 0.0
    %1781 = vmatpush1.msra.mxu0 0.0
    %1782 = vmatprep.subr.mxu0 0.0
    %1783 = vmatpush1.msra.mxu0 0.0
    %1784 = vmatprep.subr.mxu0 0.0
    %1785 = vmatpush1.msra.mxu0 0.0
    %1786 = vmatprep.subr.mxu0 0.0
    %1787 = vmatpush1.msra.mxu0 0.0
    %1788 = vmatprep.subr.mxu0 0.0
    %1789 = vmatpush1.msra.mxu0 0.0
    %1790 = vmatprep.subr.mxu0 0.0
    %1791 = vmatpush1.msra.mxu0 0.0
    %1792 = vmatprep.subr.mxu0 0.0
    %1793 = vmatpush1.msra.mxu0 0.0
    %1794 = vmatprep.subr.mxu0 0.0
    %1795 = vmatpush1.msra.mxu0 0.0
    %1796 = vmatprep.subr.mxu0 0.0
    %1797 = vmatpush1.msra.mxu0 0.0
    %1798 = vmatprep.subr.mxu0 0.0
    %1799 = vmatpush1.msra.mxu0 0.0
    %1800 = vmatprep.subr.mxu0 0.0
    %1801 = vmatpush1.msra.mxu0 0.0
    %1802 = vmatprep.subr.mxu0 0.0
    %1803 = vmatpush1.msra.mxu0 0.0
    %1804 = vmatprep.subr.mxu0 0.0
    %1805 = vmatpush1.msra.mxu0 0.0
    %1806 = vmatprep.subr.mxu0 0.0
    %1807 = vmatpush1.msra.mxu0 0.0
    %1808 = vmatprep.subr.mxu0 0.0
    %1809 = vmatpush1.msra.mxu0 0.0
    %1810 = vmatprep.subr.mxu0 0.0
    %1811 = vmatpush1.msra.mxu0 0.0
    %1812 = vmatprep.subr.mxu0 0.0
    %1813 = vmatpush1.msra.mxu0 0.0
    %1814 = vmatprep.mubr.f32.mxu0 0.0
    %1815 = vmatmul.mubr.f32.gmra.mrb[0].mxu0 %v1745
    %v1816 = vpop.f32.mrb[0].mxu0
    %v1817 = vadd.f32 %v1742, %v1816
    %v1818 = vpop.f32.mrb[0].mxu0
    %1819 = vmatprep.mubr.f32.mxu0 0.0
    %1820 = vmatmul.mubr.f32.gmra.mrb[0].mxu0 %v1748
    %v1821 = vpop.f32.mrb[0].mxu0
    %v1822 = vadd.f32 %v1742, %v1821
    %v1823 = vpop.f32.mrb[0].mxu0
    %1824 = vdwg.mxu0
    %v1825 = vadd.f32 %v1817, %v1731
    %v1826 = vadd.f32 %v1822, %v1732
    %v1827 = vld [vmem:[%s9] sm:$0x1]
    %v1828 = vld [vmem:[%s10] sm:$0x1]
    %v1829 = vsel %vm111, %v1825, 0.0
    %1830 = vadd.xlane.f32.xlu0 %v1829
    %v1831 = vpop.xlane.xlu0 %1830
    %v1832 = vsel %vm111, %v1826, 0.0
    %1833 = vadd.xlane.f32.xlu0 %v1832
    %v1834 = vpop.xlane.xlu0 %1833
    %v1835 = vrcp.pop 32.0
    %v1836 = vmul.f32 %v1831, %v1835
    %v1837 = vmul.f32 %v1834, %v1835
    %v1838 = vsub.f32 %v1825, %v1836
    %v1839 = vsub.f32 %v1826, %v1837
    %v1840 = vmul.f32 %v1838, %v1838
    %v1841 = vmul.f32 %v1839, %v1839
    %v1842 = vsel %vm111, %v1840, 0.0
    %1843 = vadd.xlane.f32.xlu0 %v1842
    %v1844 = vpop.xlane.xlu0 %1843
    %v1845 = vsel %vm111, %v1841, 0.0
    %1846 = vadd.xlane.f32.xlu0 %v1845
    %v1847 = vpop.xlane.xlu0 %1846
    %v1848 = vmul.f32 %v1844, %v1835
    %v1849 = vmul.f32 %v1847, %v1835
    %v1850 = vadd.f32 %v1848, 1e-05
    %v1851 = vadd.f32 %v1849, 1e-05
    %v1852 = vrsqrt.pop %v1850
    %v1853 = vrsqrt.pop %v1851
    %v1854 = vmul.f32 %v1838, %v1852
    %v1855 = vmul.f32 %v1839, %v1853
    %v1857 = vlaneseq
    %v1858 = vshrl.u32 %v1857, 7
    %v1859 = vsub.s32 0, %v1858
    %v1860 = vrot.slane %v1827, %v1859
    %v1862 = vmul.f32 %v1854, %v1860
    %v1863 = vmul.f32 %v1855, %v1860
    %v1865 = vlaneseq
    %v1866 = vshrl.u32 %v1865, 7
    %v1867 = vsub.s32 0, %v1866
    %v1868 = vrot.slane %v1828, %v1867
    %v1870 = vadd.f32 %v1862, %v1868
    %v1871 = vadd.f32 %v1863, %v1868
    %v1872 = vld [vmem:[#allocation9] sm:$0xff]
    %v1873 = vld [vmem:[#allocation9 + $0x8] sm:$0xff]
    %v1874 = vld [vmem:[#allocation9 + $0x10] sm:$0xff]
    %v1875 = vld [vmem:[#allocation9 + $0x18] sm:$0xff]
    %v1876 = vld [vmem:[%s12] sm:$0x1]
    %v1878 = vlaneseq
    %v1879 = vshrl.u32 %v1878, 7
    %v1880 = vsub.s32 0, %v1879
    %v1881 = vrot.slane %v1876, %v1880
    %v1884 = vsel %vm111, %v1870, 0
    %v1887 = vsel %vm111, %v1871, 0
    %1889 = vmatprep.subr.mxu0 0.0
    %1890 = vmatpush1.msra.mxu0 %v1872
    %1891 = vmatprep.subr.mxu0 0.0
    %1892 = vmatpush1.msra.mxu0 %v1873
    %1893 = vmatprep.subr.mxu0 0.0
    %1894 = vmatpush1.msra.mxu0 %v1874
    %1895 = vmatprep.subr.mxu0 0.0
    %1896 = vmatpush1.msra.mxu0 %v1875
    %1897 = vmatprep.subr.mxu0 0.0
    %1898 = vmatpush1.msra.mxu0 0.0
    %1899 = vmatprep.subr.mxu0 0.0
    %1900 = vmatpush1.msra.mxu0 0.0
    %1901 = vmatprep.subr.mxu0 0.0
    %1902 = vmatpush1.msra.mxu0 0.0
    %1903 = vmatprep.subr.mxu0 0.0
    %1904 = vmatpush1.msra.mxu0 0.0
    %1905 = vmatprep.subr.mxu0 0.0
    %1906 = vmatpush1.msra.mxu0 0.0
    %1907 = vmatprep.subr.mxu0 0.0
    %1908 = vmatpush1.msra.mxu0 0.0
    %1909 = vmatprep.subr.mxu0 0.0
    %1910 = vmatpush1.msra.mxu0 0.0
    %1911 = vmatprep.subr.mxu0 0.0
    %1912 = vmatpush1.msra.mxu0 0.0
    %1913 = vmatprep.subr.mxu0 0.0
    %1914 = vmatpush1.msra.mxu0 0.0
    %1915 = vmatprep.subr.mxu0 0.0
    %1916 = vmatpush1.msra.mxu0 0.0
    %1917 = vmatprep.subr.mxu0 0.0
    %1918 = vmatpush1.msra.mxu0 0.0
    %1919 = vmatprep.subr.mxu0 0.0
    %1920 = vmatpush1.msra.mxu0 0.0
    %1921 = vmatprep.subr.mxu0 0.0
    %1922 = vmatpush1.msra.mxu0 0.0
    %1923 = vmatprep.subr.mxu0 0.0
    %1924 = vmatpush1.msra.mxu0 0.0
    %1925 = vmatprep.subr.mxu0 0.0
    %1926 = vmatpush1.msra.mxu0 0.0
    %1927 = vmatprep.subr.mxu0 0.0
    %1928 = vmatpush1.msra.mxu0 0.0
    %1929 = vmatprep.subr.mxu0 0.0
    %1930 = vmatpush1.msra.mxu0 0.0
    %1931 = vmatprep.subr.mxu0 0.0
    %1932 = vmatpush1.msra.mxu0 0.0
    %1933 = vmatprep.subr.mxu0 0.0
    %1934 = vmatpush1.msra.mxu0 0.0
    %1935 = vmatprep.subr.mxu0 0.0
    %1936 = vmatpush1.msra.mxu0 0.0
    %1937 = vmatprep.subr.mxu0 0.0
    %1938 = vmatpush1.msra.mxu0 0.0
    %1939 = vmatprep.subr.mxu0 0.0
    %1940 = vmatpush1.msra.mxu0 0.0
    %1941 = vmatprep.subr.mxu0 0.0
    %1942 = vmatpush1.msra.mxu0 0.0
    %1943 = vmatprep.subr.mxu0 0.0
    %1944 = vmatpush1.msra.mxu0 0.0
    %1945 = vmatprep.subr.mxu0 0.0
    %1946 = vmatpush1.msra.mxu0 0.0
    %1947 = vmatprep.subr.mxu0 0.0
    %1948 = vmatpush1.msra.mxu0 0.0
    %1949 = vmatprep.subr.mxu0 0.0
    %1950 = vmatpush1.msra.mxu0 0.0
    %1951 = vmatprep.subr.mxu0 0.0
    %1952 = vmatpush1.msra.mxu0 0.0
    %1953 = vmatprep.mubr.f32.mxu0 0.0
    %1954 = vmatmul.mubr.f32.gmra.mrb[0].mxu0 %v1884
    %v1955 = vpop.f32.mrb[0].mxu0
    %v1956 = vadd.f32 %v1881, %v1955
    %v1957 = vpop.f32.mrb[0].mxu0
    %1958 = vmatprep.mubr.f32.mxu0 0.0
    %1959 = vmatmul.mubr.f32.gmra.mrb[0].mxu0 %v1887
    %v1960 = vpop.f32.mrb[0].mxu0
    %v1961 = vadd.f32 %v1881, %v1960
    %v1962 = vpop.f32.mrb[0].mxu0
    %1963 = vdwg.mxu0
    %v1964 = vmax.f32 %v1956, 0.0
    %v1965 = vmax.f32 %v1961, 0.0
    %v1966 = vld [vmem:[%s13] sm:$0xff]
    %v1967 = vld [vmem:[%s13 + $0x8] sm:$0xff]
    %v1968 = vld [vmem:[%s13 + $0x10] sm:$0xff]
    %v1969 = vld [vmem:[%s13 + $0x18] sm:$0xff]
    %v1970 = vld [vmem:[%s13 + $0x20] sm:$0xff]
    %v1971 = vld [vmem:[%s13 + $0x28] sm:$0xff]
    %v1972 = vld [vmem:[%s13 + $0x30] sm:$0xff]
    %v1973 = vld [vmem:[%s13 + $0x38] sm:$0xff]
    %v1974 = vld [vmem:[%s14] sm:$0x1]
    %v1976 = vlaneseq
    %v1977 = vshrl.u32 %v1976, 7
    %v1978 = vsub.s32 0, %v1977
    %v1979 = vrot.slane %v1974, %v1978
    %vm1981 = vcmask 523264
    %v1983 = vsel %vm1981, %v1964, 0
    %v1986 = vsel %vm1981, %v1965, 0
    %1988 = vmatprep.subr.mxu0 0.0
    %1989 = vmatpush1.msra.mxu0 %v1966
    %1990 = vmatprep.subr.mxu0 0.0
    %1991 = vmatpush1.msra.mxu0 %v1967
    %1992 = vmatprep.subr.mxu0 0.0
    %1993 = vmatpush1.msra.mxu0 %v1968
    %1994 = vmatprep.subr.mxu0 0.0
    %1995 = vmatpush1.msra.mxu0 %v1969
    %1996 = vmatprep.subr.mxu0 0.0
    %1997 = vmatpush1.msra.mxu0 %v1970
    %1998 = vmatprep.subr.mxu0 0.0
    %1999 = vmatpush1.msra.mxu0 %v1971
    %2000 = vmatprep.subr.mxu0 0.0
    %2001 = vmatpush1.msra.mxu0 %v1972
    %2002 = vmatprep.subr.mxu0 0.0
    %2003 = vmatpush1.msra.mxu0 %v1973
    %2004 = vmatprep.subr.mxu0 0.0
    %2005 = vmatpush1.msra.mxu0 0.0
    %2006 = vmatprep.subr.mxu0 0.0
    %2007 = vmatpush1.msra.mxu0 0.0
    %2008 = vmatprep.subr.mxu0 0.0
    %2009 = vmatpush1.msra.mxu0 0.0
    %2010 = vmatprep.subr.mxu0 0.0
    %2011 = vmatpush1.msra.mxu0 0.0
    %2012 = vmatprep.subr.mxu0 0.0
    %2013 = vmatpush1.msra.mxu0 0.0
    %2014 = vmatprep.subr.mxu0 0.0
    %2015 = vmatpush1.msra.mxu0 0.0
    %2016 = vmatprep.subr.mxu0 0.0
    %2017 = vmatpush1.msra.mxu0 0.0
    %2018 = vmatprep.subr.mxu0 0.0
    %2019 = vmatpush1.msra.mxu0 0.0
    %2020 = vmatprep.subr.mxu0 0.0
    %2021 = vmatpush1.msra.mxu0 0.0
    %2022 = vmatprep.subr.mxu0 0.0
    %2023 = vmatpush1.msra.mxu0 0.0
    %2024 = vmatprep.subr.mxu0 0.0
    %2025 = vmatpush1.msra.mxu0 0.0
    %2026 = vmatprep.subr.mxu0 0.0
    %2027 = vmatpush1.msra.mxu0 0.0
    %2028 = vmatprep.subr.mxu0 0.0
    %2029 = vmatpush1.msra.mxu0 0.0
    %2030 = vmatprep.subr.mxu0 0.0
    %2031 = vmatpush1.msra.mxu0 0.0
    %2032 = vmatprep.subr.mxu0 0.0
    %2033 = vmatpush1.msra.mxu0 0.0
    %2034 = vmatprep.subr.mxu0 0.0
    %2035 = vmatpush1.msra.mxu0 0.0
    %2036 = vmatprep.subr.mxu0 0.0
    %2037 = vmatpush1.msra.mxu0 0.0
    %2038 = vmatprep.subr.mxu0 0.0
    %2039 = vmatpush1.msra.mxu0 0.0
    %2040 = vmatprep.subr.mxu0 0.0
    %2041 = vmatpush1.msra.mxu0 0.0
    %2042 = vmatprep.subr.mxu0 0.0
    %2043 = vmatpush1.msra.mxu0 0.0
    %2044 = vmatprep.subr.mxu0 0.0
    %2045 = vmatpush1.msra.mxu0 0.0
    %2046 = vmatprep.subr.mxu0 0.0
    %2047 = vmatpush1.msra.mxu0 0.0
    %2048 = vmatprep.subr.mxu0 0.0
    %2049 = vmatpush1.msra.mxu0 0.0
    %2050 = vmatprep.subr.mxu0 0.0
    %2051 = vmatpush1.msra.mxu0 0.0
    %2052 = vmatprep.mubr.f32.mxu0 0.0
    %2053 = vmatmul.mubr.f32.gmra.mrb[0].mxu0 %v1983
    %v2054 = vpop.f32.mrb[0].mxu0
    %v2055 = vadd.f32 %v1979, %v2054
    %v2056 = vpop.f32.mrb[0].mxu0
    %2057 = vmatprep.mubr.f32.mxu0 0.0
    %2058 = vmatmul.mubr.f32.gmra.mrb[0].mxu0 %v1986
    %v2059 = vpop.f32.mrb[0].mxu0
    %v2060 = vadd.f32 %v1979, %v2059
    %v2061 = vpop.f32.mrb[0].mxu0
    %2062 = vdwg.mxu0
    %v2063 = vadd.f32 %v1870, %v2055
    %v2064 = vadd.f32 %v1871, %v2060
    %v2065 = vld [vmem:[%s15] sm:$0x1]
    %v2066 = vld [vmem:[%s16] sm:$0x1]
    %v2067 = vsel %vm111, %v2063, 0.0
    %2068 = vadd.xlane.f32.xlu0 %v2067
    %v2069 = vpop.xlane.xlu0 %2068
    %v2070 = vsel %vm111, %v2064, 0.0
    %2071 = vadd.xlane.f32.xlu0 %v2070
    %v2072 = vpop.xlane.xlu0 %2071
    %v2073 = vmul.f32 %v2069, %v1835
    %v2074 = vmul.f32 %v2072, %v1835
    %v2075 = vsub.f32 %v2063, %v2073
    %v2076 = vsub.f32 %v2064, %v2074
    %v2077 = vmul.f32 %v2075, %v2075
    %v2078 = vmul.f32 %v2076, %v2076
    %v2079 = vsel %vm111, %v2077, 0.0
    %2080 = vadd.xlane.f32.xlu0 %v2079
    %v2081 = vpop.xlane.xlu0 %2080
    %v2082 = vsel %vm111, %v2078, 0.0
    %2083 = vadd.xlane.f32.xlu0 %v2082
    %v2084 = vpop.xlane.xlu0 %2083
    %v2085 = vmul.f32 %v2081, %v1835
    %v2086 = vmul.f32 %v2084, %v1835
    %v2087 = vadd.f32 %v2085, 1e-05
    %v2088 = vadd.f32 %v2086, 1e-05
    %v2089 = vrsqrt.pop %v2087
    %v2090 = vrsqrt.pop %v2088
    %v2091 = vmul.f32 %v2075, %v2089
    %v2092 = vmul.f32 %v2076, %v2090
    %v2094 = vlaneseq
    %v2095 = vshrl.u32 %v2094, 7
    %v2096 = vsub.s32 0, %v2095
    %v2097 = vrot.slane %v2065, %v2096
    %v2099 = vmul.f32 %v2091, %v2097
    %v2100 = vmul.f32 %v2092, %v2097
    %v2102 = vlaneseq
    %v2103 = vshrl.u32 %v2102, 7
    %v2104 = vsub.s32 0, %v2103
    %v2105 = vrot.slane %v2066, %v2104
    %v2107 = vadd.f32 %v2099, %v2105
    %v2108 = vadd.f32 %v2100, %v2105
    %2109 = vst.msk [vmem:[#allocation10] sm:$0xff] %vm111, %v2107
    %2110 = vst.msk [vmem:[#allocation10 + $0x8] sm:$0xff] %vm111, %v2108
    // Predicated region
    $region82: #{tpu_custom_call.1} parent=1 // pred_check
      _
    $region83: #{tpu_custom_call.1} parent=1 // pred_check_branch
      %2112 = sbr.rel (0) target = $region85
    $region84: #{tpu_custom_call.1} parent=1 // pred_region
      %s2114 = ssub.s32 256, 256
      %2115 = vsyncadd [#allocation6], %s2114
      %s2116 = sshll.u32 [#allocation10], 4
      %s2117 = int_to_ptr.vmem [resolvable:$true] %s2116
      %2122 = dma.vmem_to_hbm [thread:$0]  %s2117, 256, %s17, [#allocation6], 128, 128, 8
    $region85: #{tpu_custom_call.1} parent=1 // pred_fallthru
      _
    // Predicated region
    $region86: #{tpu_custom_call.1} parent=1 // pred_check
      _
    $region87: #{tpu_custom_call.1} parent=1 // pred_check_branch
      %2124 = sbr.rel (0) target = $region89
    $region88: #{tpu_custom_call.1} parent=1 // pred_region
      %2125 = dma.done [#allocation6], 256
    $region89: #{tpu_custom_call.1} parent=1 // pred_fallthru
      _
    %2126 = vsyncpa [#allocation5], 1
    %2127 = vsyncpa [#allocation8], 1
    %2128 = vsyncpa [#allocation6], 1

</llo_original>
